<compile_context>
chip_gen: v7x
topology: tpu7x:2x2x1
jax: 0.10.0
libtpu: 0.0.40
codegen_flags: <defaults>
</compile_context>

<pallas_src>
import jax
import jax.numpy as jnp
from jax.experimental import pallas as pl
from jax.experimental.pallas import tpu as pltpu

# Original (logical) sizes from the PyTorch module.
hidden_size = 100
input_size = 784
num_classes = 10
num_hidden = 4  # -> 4 Linear layers total

# Padded (physical) sizes for lane-dense TPU layout.
HID_PAD = 128   # hidden width padded to one lane group
OUT_PAD = 128   # output width padded for unmasked (lane-dense) stores
TB_MAX = 512    # max batch tile


def mlp_kernel(x_ref,
               w1_ref, b1_ref,
               w2_ref, b2_ref,
               w3_ref, b3_ref,
               w4_ref, b4_ref,
               o_ref):
    # x arrives straight from HBM as f32 (no wrapper pad/cast pass); cast to
    # bf16 on the VPU so every matmul feeds the bf16-native MXU, accumulating
    # in f32 via preferred_element_type.
    x = x_ref[...].astype(jnp.bfloat16)
    # Layer 1: 784 -> 128, ReLU
    h = jnp.dot(x, w1_ref[...], preferred_element_type=jnp.float32)
    h = jnp.maximum(h + b1_ref[...], 0.0).astype(jnp.bfloat16)
    # Layer 2: 128 -> 128, ReLU
    h = jnp.dot(h, w2_ref[...], preferred_element_type=jnp.float32)
    h = jnp.maximum(h + b2_ref[...], 0.0).astype(jnp.bfloat16)
    # Layer 3: 128 -> 128, ReLU
    h = jnp.dot(h, w3_ref[...], preferred_element_type=jnp.float32)
    h = jnp.maximum(h + b3_ref[...], 0.0).astype(jnp.bfloat16)
    # Layer 4: 128 -> 128 (only first 10 lanes meaningful), no activation.
    out = jnp.dot(h, w4_ref[...], preferred_element_type=jnp.float32)
    o_ref[...] = (out + b4_ref[...]).astype(o_ref.dtype)  # bf16 writeback


def _pad2d(a, rows, cols):
    return jnp.pad(a, ((0, rows - a.shape[0]), (0, cols - a.shape[1])))


def prepare_padded_params(params):
    """params: list of (W [in,out] f32, b [1,out] f32) at logical sizes.

    Returns the flat, padded, dtype-converted parameter list the kernel uses:
    weights bf16 (lane-dense 128-wide output dims), biases f32 (bias-add runs
    on the f32 accumulator). Zero padding keeps padded lanes exactly zero.
    """
    (w1, b1), (w2, b2), (w3, b3), (w4, b4) = params
    w1p = _pad2d(w1, input_size, HID_PAD).astype(jnp.bfloat16)
    w2p = _pad2d(w2, HID_PAD, HID_PAD).astype(jnp.bfloat16)
    w3p = _pad2d(w3, HID_PAD, HID_PAD).astype(jnp.bfloat16)
    w4p = _pad2d(w4, HID_PAD, OUT_PAD).astype(jnp.bfloat16)
    b1p = _pad2d(b1, 1, HID_PAD)
    b2p = _pad2d(b2, 1, HID_PAD)
    b3p = _pad2d(b3, 1, HID_PAD)
    b4p = _pad2d(b4, 1, OUT_PAD)
    return [w1p, b1p, w2p, b2p, w3p, b3p, w4p, b4p]


def _batch_tiling(B):
    """Pick (B_pad, TB): big tiles (memory-bound), but keep >= 2 grid steps
    whenever the batch allows so the "parallel" batch axis can shard across
    v7x's 2 TensorCores (no-op on v5e/v6e, which have 1 TC)."""
    if B >= 2 * TB_MAX:
        TB = TB_MAX
        B_pad = pl.cdiv(B, TB) * TB
    elif B >= 32:
        B_pad = ((B + 31) // 32) * 32   # multiple of 32 -> TB multiple of 16
        TB = B_pad // 2                 # exactly two grid steps
    else:
        B_pad = ((B + 7) // 8) * 8
        TB = B_pad                      # single full-batch block
    return B_pad, TB


def neural_net_forward(x, params):
    """x: [B, input_size] f32; params: list of (W [in,out], b [1,out]) f32."""
    B = x.shape[0]
    B_pad, TB = _batch_tiling(B)

    # Only a (cheap, often no-op) batch pad; features stay 784 and f32.
    x_p = x if B_pad == B else jnp.pad(x, ((0, B_pad - B), (0, 0)))

    flat = prepare_padded_params(params)

    resident = lambda a: pl.BlockSpec(a.shape, lambda i: (0, 0))
    in_specs = [pl.BlockSpec((TB, input_size), lambda i: (i, 0))]  # tiled x
    in_specs += [resident(a) for a in flat]                        # VMEM-resident

    out_shape = jax.ShapeDtypeStruct((B_pad, OUT_PAD), jnp.bfloat16)
    out_spec = pl.BlockSpec((TB, OUT_PAD), lambda i: (i, 0))

    param_bytes = sum(int(a.size) * a.dtype.itemsize for a in flat)
    cost = pl.CostEstimate(
        flops=2 * B_pad * (input_size * HID_PAD + 3 * HID_PAD * HID_PAD),
        transcendentals=0,
        bytes_accessed=B_pad * input_size * 4 + B_pad * OUT_PAD * 2 + param_bytes,
    )

    out_padded = pl.pallas_call(
        mlp_kernel,
        out_shape=out_shape,
        grid=(B_pad // TB,),
        in_specs=in_specs,
        out_specs=out_spec,
        compiler_params=pltpu.CompilerParams(
            dimension_semantics=("parallel",)),
        cost_estimate=cost,
    )(x_p, *flat)

    return out_padded[:B, :num_classes].astype(jnp.float32)


def init_params(key):
    """Deterministic init mimicking nn.Linear default U(-1/sqrt(fan_in), +)."""
    dims = [input_size] + [hidden_size] * (num_hidden - 1) + [num_classes]
    params = []
    for i in range(len(dims) - 1):
        fan_in, fan_out = dims[i], dims[i + 1]
        key, kw, kb = jax.random.split(key, 3)
        bound = 1.0 / jnp.sqrt(jnp.float32(fan_in))
        w = jax.random.uniform(kw, (fan_in, fan_out), jnp.float32,
                               minval=-bound, maxval=bound)
        b = jax.random.uniform(kb, (1, fan_out), jnp.float32,
                               minval=-bound, maxval=bound)
        params.append((w, b))
    return params


def reference_forward_f32(x, params):
    """Pure f32 reference matching the PyTorch module's math."""
    h = x
    for i, (w, b) in enumerate(params):
        h = h @ w + b
        if i < len(params) - 1:
            h = jnp.maximum(h, 0.0)
    return h


def reference_forward_bf16(x, params):
    """Reference mimicking the kernel numerics (bf16 operands/output,
    f32 accumulation)."""
    flat = prepare_padded_params(params)
    h = x.astype(jnp.bfloat16)
    for li in range(3):
        w, b = flat[2 * li], flat[2 * li + 1]
        h = jnp.dot(h, w, preferred_element_type=jnp.float32) + b
        h = jnp.maximum(h, 0.0).astype(jnp.bfloat16)
    w, b = flat[6], flat[7]
    out = (jnp.dot(h, w, preferred_element_type=jnp.float32) + b)
    return out.astype(jnp.bfloat16).astype(jnp.float32)[:, :num_classes]


if __name__ == "__main__":
    key = jax.random.PRNGKey(0)
    key, kx = jax.random.split(key)
    batch = 200  # intentionally not tile-aligned: exercises batch padding
    x = jax.random.normal(kx, (batch, input_size), jnp.float32)

    params = init_params(key)

    out = neural_net_forward(x, params)
    out = jax.block_until_ready(out)
    assert out.shape == (batch, num_classes)

    # Tight check against a reference with matching bf16 numerics.
    ref_bf16 = reference_forward_bf16(x, params)
    assert jnp.allclose(out, ref_bf16, atol=2e-2, rtol=2e-2)

    # Loose sanity check against the full-f32 PyTorch-equivalent math
    # (bf16 weights/activations/output introduce ~1e-2 level error).
    ref_f32 = reference_forward_f32(x, params)
    assert jnp.allclose(out, ref_f32, atol=1e-1, rtol=1e-1)

    print("KERNEL_OK")
</pallas_src>

<mosaic_0001>
module attributes {stable_mosaic.version = 11 : i64} {
  func.func @mlp_kernel(%arg0: i32, %arg1: memref<112x784xf32, #tpu.memory_space<vmem>>, %arg2: memref<784x128xbf16, #tpu.memory_space<vmem>>, %arg3: memref<1x128xf32, #tpu.memory_space<vmem>>, %arg4: memref<128x128xbf16, #tpu.memory_space<vmem>>, %arg5: memref<1x128xf32, #tpu.memory_space<vmem>>, %arg6: memref<128x128xbf16, #tpu.memory_space<vmem>>, %arg7: memref<1x128xf32, #tpu.memory_space<vmem>>, %arg8: memref<128x128xbf16, #tpu.memory_space<vmem>>, %arg9: memref<1x128xf32, #tpu.memory_space<vmem>>, %arg10: memref<112x128xbf16, #tpu.memory_space<vmem>>) attributes {dimension_semantics = [#tpu.dimension_semantics<parallel>], iteration_bounds = array<i64: 2>, scalar_prefetch = 0 : i64, scratch_operands = 0 : i64, tpu.core_type = #tpu.core_type<tc>, window_params = [{transform_indices = @transform_0, window_bounds = array<i64: 112, 784>}, {pipeline_mode = #tpu.pipeline_mode<synchronous>, transform_indices = @transform_1, window_bounds = array<i64: 784, 128>}, {pipeline_mode = #tpu.pipeline_mode<synchronous>, transform_indices = @transform_2, window_bounds = array<i64: 1, 128>}, {pipeline_mode = #tpu.pipeline_mode<synchronous>, transform_indices = @transform_3, window_bounds = array<i64: 128, 128>}, {pipeline_mode = #tpu.pipeline_mode<synchronous>, transform_indices = @transform_4, window_bounds = array<i64: 1, 128>}, {pipeline_mode = #tpu.pipeline_mode<synchronous>, transform_indices = @transform_5, window_bounds = array<i64: 128, 128>}, {pipeline_mode = #tpu.pipeline_mode<synchronous>, transform_indices = @transform_6, window_bounds = array<i64: 1, 128>}, {pipeline_mode = #tpu.pipeline_mode<synchronous>, transform_indices = @transform_7, window_bounds = array<i64: 128, 128>}, {pipeline_mode = #tpu.pipeline_mode<synchronous>, transform_indices = @transform_8, window_bounds = array<i64: 1, 128>}, {transform_indices = @transform_9, window_bounds = array<i64: 112, 128>}]} {
    %c0 = arith.constant 0 : index
    %c0_0 = arith.constant 0 : index
    %0 = vector.load %arg1[%c0, %c0_0] : memref<112x784xf32, #tpu.memory_space<vmem>>, vector<112x784xf32>
    %1 = arith.truncf %0 : vector<112x784xf32> to vector<112x784xbf16>
    %c0_1 = arith.constant 0 : index
    %c0_2 = arith.constant 0 : index
    %2 = vector.load %arg2[%c0_1, %c0_2] : memref<784x128xbf16, #tpu.memory_space<vmem>>, vector<784x128xbf16>
    %cst = arith.constant dense<0.000000e+00> : vector<112x128xf32>
    %3 = tpu.matmul %1, %2, %cst {dimension_numbers = #tpu.dot_dimension_numbers<[1], [0], [0], [1], [0, 0, 1, 1], [], []>} : vector<112x784xbf16>, vector<784x128xbf16>, vector<112x128xf32> -> vector<112x128xf32>
    %c0_3 = arith.constant 0 : index
    %c0_4 = arith.constant 0 : index
    %4 = vector.load %arg3[%c0_3, %c0_4] : memref<1x128xf32, #tpu.memory_space<vmem>>, vector<1x128xf32>
    %5 = vector.broadcast %4 : vector<1x128xf32> to vector<112x128xf32>
    %6 = arith.addf %3, %5 : vector<112x128xf32>
    %cst_5 = arith.constant 0.000000e+00 : f32
    %7 = vector.broadcast %cst_5 : f32 to vector<112x128xf32>
    %8 = arith.maximumf %6, %7 : vector<112x128xf32>
    %9 = arith.truncf %8 : vector<112x128xf32> to vector<112x128xbf16>
    %c0_6 = arith.constant 0 : index
    %c0_7 = arith.constant 0 : index
    %10 = vector.load %arg4[%c0_6, %c0_7] : memref<128x128xbf16, #tpu.memory_space<vmem>>, vector<128x128xbf16>
    %cst_8 = arith.constant dense<0.000000e+00> : vector<112x128xf32>
    %11 = tpu.matmul %9, %10, %cst_8 {dimension_numbers = #tpu.dot_dimension_numbers<[1], [0], [0], [1], [0, 0, 1, 1], [], []>} : vector<112x128xbf16>, vector<128x128xbf16>, vector<112x128xf32> -> vector<112x128xf32>
    %c0_9 = arith.constant 0 : index
    %c0_10 = arith.constant 0 : index
    %12 = vector.load %arg5[%c0_9, %c0_10] : memref<1x128xf32, #tpu.memory_space<vmem>>, vector<1x128xf32>
    %13 = vector.broadcast %12 : vector<1x128xf32> to vector<112x128xf32>
    %14 = arith.addf %11, %13 : vector<112x128xf32>
    %cst_11 = arith.constant 0.000000e+00 : f32
    %15 = vector.broadcast %cst_11 : f32 to vector<112x128xf32>
    %16 = arith.maximumf %14, %15 : vector<112x128xf32>
    %17 = arith.truncf %16 : vector<112x128xf32> to vector<112x128xbf16>
    %c0_12 = arith.constant 0 : index
    %c0_13 = arith.constant 0 : index
    %18 = vector.load %arg6[%c0_12, %c0_13] : memref<128x128xbf16, #tpu.memory_space<vmem>>, vector<128x128xbf16>
    %cst_14 = arith.constant dense<0.000000e+00> : vector<112x128xf32>
    %19 = tpu.matmul %17, %18, %cst_14 {dimension_numbers = #tpu.dot_dimension_numbers<[1], [0], [0], [1], [0, 0, 1, 1], [], []>} : vector<112x128xbf16>, vector<128x128xbf16>, vector<112x128xf32> -> vector<112x128xf32>
    %c0_15 = arith.constant 0 : index
    %c0_16 = arith.constant 0 : index
    %20 = vector.load %arg7[%c0_15, %c0_16] : memref<1x128xf32, #tpu.memory_space<vmem>>, vector<1x128xf32>
    %21 = vector.broadcast %20 : vector<1x128xf32> to vector<112x128xf32>
    %22 = arith.addf %19, %21 : vector<112x128xf32>
    %cst_17 = arith.constant 0.000000e+00 : f32
    %23 = vector.broadcast %cst_17 : f32 to vector<112x128xf32>
    %24 = arith.maximumf %22, %23 : vector<112x128xf32>
    %25 = arith.truncf %24 : vector<112x128xf32> to vector<112x128xbf16>
    %c0_18 = arith.constant 0 : index
    %c0_19 = arith.constant 0 : index
    %26 = vector.load %arg8[%c0_18, %c0_19] : memref<128x128xbf16, #tpu.memory_space<vmem>>, vector<128x128xbf16>
    %cst_20 = arith.constant dense<0.000000e+00> : vector<112x128xf32>
    %27 = tpu.matmul %25, %26, %cst_20 {dimension_numbers = #tpu.dot_dimension_numbers<[1], [0], [0], [1], [0, 0, 1, 1], [], []>} : vector<112x128xbf16>, vector<128x128xbf16>, vector<112x128xf32> -> vector<112x128xf32>
    %c0_21 = arith.constant 0 : index
    %c0_22 = arith.constant 0 : index
    %28 = vector.load %arg9[%c0_21, %c0_22] : memref<1x128xf32, #tpu.memory_space<vmem>>, vector<1x128xf32>
    %29 = vector.broadcast %28 : vector<1x128xf32> to vector<112x128xf32>
    %30 = arith.addf %27, %29 : vector<112x128xf32>
    %31 = arith.truncf %30 : vector<112x128xf32> to vector<112x128xbf16>
    %c0_23 = arith.constant 0 : index
    %c0_24 = arith.constant 0 : index
    %32 = vector.load %arg10[%c0_23, %c0_24] : memref<112x128xbf16, #tpu.memory_space<vmem>>, vector<112x128xbf16>
    tpu.vector_store %arg10[%c0_23, %c0_24], %31 {strides = array<i32>} : memref<112x128xbf16, #tpu.memory_space<vmem>>, vector<112x128xbf16>,
    return
  }
  func.func @transform_0(%arg0: i32) -> (i32, i32) {
    %c0_i32 = arith.constant 0 : i32
    %c0_i32_0 = arith.constant 0 : i32
    return %arg0, %c0_i32 : i32, i32
  }
  func.func @transform_1(%arg0: i32) -> (i32, i32) {
    %c0_i32 = arith.constant 0 : i32
    %c0_i32_0 = arith.constant 0 : i32
    %c0_i32_1 = arith.constant 0 : i32
    return %c0_i32, %c0_i32_0 : i32, i32
  }
  func.func @transform_2(%arg0: i32) -> (i32, i32) {
    %c0_i32 = arith.constant 0 : i32
    %c0_i32_0 = arith.constant 0 : i32
    %c0_i32_1 = arith.constant 0 : i32
    return %c0_i32, %c0_i32_0 : i32, i32
  }
  func.func @transform_3(%arg0: i32) -> (i32, i32) {
    %c0_i32 = arith.constant 0 : i32
    %c0_i32_0 = arith.constant 0 : i32
    %c0_i32_1 = arith.constant 0 : i32
    return %c0_i32, %c0_i32_0 : i32, i32
  }
  func.func @transform_4(%arg0: i32) -> (i32, i32) {
    %c0_i32 = arith.constant 0 : i32
    %c0_i32_0 = arith.constant 0 : i32
    %c0_i32_1 = arith.constant 0 : i32
    return %c0_i32, %c0_i32_0 : i32, i32
  }
  func.func @transform_5(%arg0: i32) -> (i32, i32) {
    %c0_i32 = arith.constant 0 : i32
    %c0_i32_0 = arith.constant 0 : i32
    %c0_i32_1 = arith.constant 0 : i32
    return %c0_i32, %c0_i32_0 : i32, i32
  }
  func.func @transform_6(%arg0: i32) -> (i32, i32) {
    %c0_i32 = arith.constant 0 : i32
    %c0_i32_0 = arith.constant 0 : i32
    %c0_i32_1 = arith.constant 0 : i32
    return %c0_i32, %c0_i32_0 : i32, i32
  }
  func.func @transform_7(%arg0: i32) -> (i32, i32) {
    %c0_i32 = arith.constant 0 : i32
    %c0_i32_0 = arith.constant 0 : i32
    %c0_i32_1 = arith.constant 0 : i32
    return %c0_i32, %c0_i32_0 : i32, i32
  }
  func.func @transform_8(%arg0: i32) -> (i32, i32) {
    %c0_i32 = arith.constant 0 : i32
    %c0_i32_0 = arith.constant 0 : i32
    %c0_i32_1 = arith.constant 0 : i32
    return %c0_i32, %c0_i32_0 : i32, i32
  }
  func.func @transform_9(%arg0: i32) -> (i32, i32) {
    %c0_i32 = arith.constant 0 : i32
    %c0_i32_0 = arith.constant 0 : i32
    return %arg0, %c0_i32 : i32, i32
  }
}

</mosaic_0001>

<llo_original>
// kernel: tpu_custom_call.1
$region0: #{tpu_custom_call.1}
  #allocation0 [shape = 'u32[]', space=smem, size = 0x4, offset = 0x4, fixed_abs, tag = 'smem constant byte address 0x4 - core index']
  #allocation1 [shape = 'u32[144,128]{1,0:T(1,128)}', space=vmem, size = 0x12000, scoped, tag = 'internal scratch']
  %s0 = inlined_call_operand.hbm [shape: f32[224,784], index: 0, kind: input, shape index: {}]
  %s1 = inlined_call_operand.hbm [shape: bf16[784,128], index: 1, kind: input, shape index: {}]
  %s2 = inlined_call_operand.vmem [shape: f32[1,128], index: 2, kind: input, shape index: {}]
  %s3 = inlined_call_operand.hbm [shape: bf16[128,128], index: 3, kind: input, shape index: {}]
  %s4 = inlined_call_operand.vmem [shape: f32[1,128], index: 4, kind: input, shape index: {}]
  %s5 = inlined_call_operand.hbm [shape: bf16[128,128], index: 5, kind: input, shape index: {}]
  %s6 = inlined_call_operand.vmem [shape: f32[1,128], index: 6, kind: input, shape index: {}]
  %s7 = inlined_call_operand.hbm [shape: bf16[128,128], index: 7, kind: input, shape index: {}]
  %s8 = inlined_call_operand.vmem [shape: f32[1,128], index: 8, kind: input, shape index: {}]
  %s9 = inlined_call_operand.hbm [shape: bf16[224,128], index: 9, kind: output, shape index: {}]
  %s10 = sld [smem:[#allocation0]]
  $region89: #{tpu_custom_call.1} parent=0
    _
  %s12 = ssub.s32 1, %s10
  %s13 = scalar_select 0, %s12, %s10
  $region1: #{tpu_custom_call.1} parent=0
    #allocation2 [shape = 'u8[802816]{0}', space=vmem, size = 0xc4000, scoped, tag = 'input window, operand 0']
    #allocation3 [shape = 's32[2]{0}', space=sflag, size = 0x8, scoped, tag = 'scoped memory for tpu_custom_call.1']
    #allocation4 [shape = 's32[2]{0}', space=sflag, size = 0x8, scoped, tag = 'scoped memory for tpu_custom_call.1']
    #allocation5 [shape = 'u8[200704]{0}', space=vmem, size = 0x31000, scoped, tag = 'input window, operand 1, single buffered']
    #allocation6 [shape = 's32[1]{0}', space=sflag, size = 0x4, scoped, tag = 'scoped memory for tpu_custom_call.1']
    #allocation7 [shape = 'u8[32768]{0}', space=vmem, size = 0x8000, scoped, tag = 'input window, operand 3, single buffered']
    #allocation8 [shape = 'u8[32768]{0}', space=vmem, size = 0x8000, scoped, tag = 'input window, operand 5, single buffered']
    #allocation9 [shape = 's32[1]{0}', space=sflag, size = 0x4, scoped, tag = 'scoped memory for tpu_custom_call.1']
    #allocation10 [shape = 'u8[32768]{0}', space=vmem, size = 0x8000, scoped, tag = 'input window, operand 7, single buffered']
    #allocation11 [shape = 'u8[57344]{0}', space=vmem, size = 0xe000, scoped, tag = 'output window, operand 0']
    %14 = vsyncpa [#allocation3], 0
    %s15 = scalar_lea.sflag [#allocation3], 1
    %16 = vsyncpa %s15, 0
    %17 = vsyncpa [#allocation6], 0
    %18 = vsyncpa [#allocation9], 0
    %19 = vsyncpa [#allocation4], 0
    %s20 = scalar_lea.sflag [#allocation4], 1
    %21 = vsyncpa %s20, 0
    loop: start=0, step=1, limit=4
    $region2: #{tpu_custom_call.1} parent=1 // loop_pre_header
      _
    $region3: #{tpu_custom_call.1} parent=1 // loop_header
      %s23 = sphi 0, %s27
      %p24 = scmp.ge.s32.totalorder %s23, 4
      %s33 = sphi 0, %s35
      %s36 = sphi 0, %s33
      %s37 = sphi 0, %s36
      %s53 = sphi 0, %s37
      %s57 = sphi 0, %s57
      %s59 = sphi 0, %s57
      %s60 = sphi 0, %s59
      %s74 = sphi 0, %s60
      %s78 = sphi 0, %s78
      %s80 = sphi 0, %s78
      %s81 = sphi 0, %s80
      %s95 = sphi 0, %s81
      %s99 = sphi 0, %s99
      %s101 = sphi 0, %s99
      %s102 = sphi 0, %s101
      %s116 = sphi 0, %s102
      %s120 = sphi 0, %s120
      %s122 = sphi 0, %s120
      %s123 = sphi 0, %s122
      %s137 = sphi 0, %s123
      %s141 = sphi 0, %s141
      %s143 = sphi 0, %s141
      %s144 = sphi 0, %s143
      %s158 = sphi 0, %s144
      %s162 = sphi 0, %s162
      %s164 = sphi 0, %s162
      %s165 = sphi 0, %s164
      %s179 = sphi 0, %s165
      %s183 = sphi 0, %s183
      %s185 = sphi 0, %s183
      %s186 = sphi 0, %s185
      %s200 = sphi 0, %s186
      %s204 = sphi 0, %s204
      %s206 = sphi 0, %s204
      %s207 = sphi 0, %s206
      %s221 = sphi 0, %s207
      %s227 = sphi 0, %s229
      %s230 = sphi 0, %s227
      %s231 = sphi 0, %s230
      %s247 = sphi 0, %s231
    $region4: #{tpu_custom_call.1} parent=1 // loop_header_branch
      %26 = sbr.rel (%p24) target = $region8
    $region5: #{tpu_custom_call.1} parent=1 // loop_body
      %s28 = ssub.s32 %s23, 1
      %s29 = ssub.s32 %s23, 2
      %s30 = sadd.s32 %s23, 1
      %s31 = ssub.s32 %s23, %s30
      %p32 = scmp.eq.s32.totalorder %s31, 0
      %s34 = sadd.s32 %s33, 1
      %s35 = scalar_select %p32, %s33, %s34
      %p38 = pneg %p32
      %p39 = scmp.eq.s32.totalorder %s23, 1
      %p40 = por %p38, %p39
      %p41 = scmp.ne.s32.totalorder %s33, %s36
      %p42 = scmp.eq.s32.totalorder %s23, 0
      %p43 = por %p41, %p42
      %p44 = scmp.ne.s32.totalorder %s33, %s36
      %p45 = scmp.eq.s32.totalorder %s28, 1
      %p46 = por %p44, %p45
      %p47 = scmp.ne.s32.totalorder %s36, %s37
      %p48 = scmp.eq.s32.totalorder %s28, 0
      %p49 = por %p47, %p48
      %p50 = scmp.ne.s32.totalorder %s36, %s37
      %p51 = scmp.eq.s32.totalorder %s29, 1
      %p52 = por %p50, %p51
      %p54 = scmp.ne.s32.totalorder %s37, %s53
      %p55 = scmp.eq.s32.totalorder %s29, 0
      %p56 = por %p54, %p55
      %s58 = sadd.s32 %s57, 1
      %p61 = scmp.eq.s32.totalorder %s23, 1
      %p62 = scmp.ne.s32.totalorder %s57, %s59
      %p63 = scmp.eq.s32.totalorder %s23, 0
      %p64 = por %p62, %p63
      %p65 = scmp.ne.s32.totalorder %s57, %s59
      %p66 = scmp.eq.s32.totalorder %s28, 1
      %p67 = por %p65, %p66
      %p68 = scmp.ne.s32.totalorder %s59, %s60
      %p69 = scmp.eq.s32.totalorder %s28, 0
      %p70 = por %p68, %p69
      %p71 = scmp.ne.s32.totalorder %s59, %s60
      %p72 = scmp.eq.s32.totalorder %s29, 1
      %p73 = por %p71, %p72
      %p75 = scmp.ne.s32.totalorder %s60, %s74
      %p76 = scmp.eq.s32.totalorder %s29, 0
      %p77 = por %p75, %p76
      %s79 = sadd.s32 %s78, 1
      %p82 = scmp.eq.s32.totalorder %s23, 1
      %p83 = scmp.ne.s32.totalorder %s78, %s80
      %p84 = scmp.eq.s32.totalorder %s23, 0
      %p85 = por %p83, %p84
      %p86 = scmp.ne.s32.totalorder %s78, %s80
      %p87 = scmp.eq.s32.totalorder %s28, 1
      %p88 = por %p86, %p87
      %p89 = scmp.ne.s32.totalorder %s80, %s81
      %p90 = scmp.eq.s32.totalorder %s28, 0
      %p91 = por %p89, %p90
      %p92 = scmp.ne.s32.totalorder %s80, %s81
      %p93 = scmp.eq.s32.totalorder %s29, 1
      %p94 = por %p92, %p93
      %p96 = scmp.ne.s32.totalorder %s81, %s95
      %p97 = scmp.eq.s32.totalorder %s29, 0
      %p98 = por %p96, %p97
      %s100 = sadd.s32 %s99, 1
      %p103 = scmp.eq.s32.totalorder %s23, 1
      %p104 = scmp.ne.s32.totalorder %s99, %s101
      %p105 = scmp.eq.s32.totalorder %s23, 0
      %p106 = por %p104, %p105
      %p107 = scmp.ne.s32.totalorder %s99, %s101
      %p108 = scmp.eq.s32.totalorder %s28, 1
      %p109 = por %p107, %p108
      %p110 = scmp.ne.s32.totalorder %s101, %s102
      %p111 = scmp.eq.s32.totalorder %s28, 0
      %p112 = por %p110, %p111
      %p113 = scmp.ne.s32.totalorder %s101, %s102
      %p114 = scmp.eq.s32.totalorder %s29, 1
      %p115 = por %p113, %p114
      %p117 = scmp.ne.s32.totalorder %s102, %s116
      %p118 = scmp.eq.s32.totalorder %s29, 0
      %p119 = por %p117, %p118
      %s121 = sadd.s32 %s120, 1
      %p124 = scmp.eq.s32.totalorder %s23, 1
      %p125 = scmp.ne.s32.totalorder %s120, %s122
      %p126 = scmp.eq.s32.totalorder %s23, 0
      %p127 = por %p125, %p126
      %p128 = scmp.ne.s32.totalorder %s120, %s122
      %p129 = scmp.eq.s32.totalorder %s28, 1
      %p130 = por %p128, %p129
      %p131 = scmp.ne.s32.totalorder %s122, %s123
      %p132 = scmp.eq.s32.totalorder %s28, 0
      %p133 = por %p131, %p132
      %p134 = scmp.ne.s32.totalorder %s122, %s123
      %p135 = scmp.eq.s32.totalorder %s29, 1
      %p136 = por %p134, %p135
      %p138 = scmp.ne.s32.totalorder %s123, %s137
      %p139 = scmp.eq.s32.totalorder %s29, 0
      %p140 = por %p138, %p139
      %s142 = sadd.s32 %s141, 1
      %p145 = scmp.eq.s32.totalorder %s23, 1
      %p146 = scmp.ne.s32.totalorder %s141, %s143
      %p147 = scmp.eq.s32.totalorder %s23, 0
      %p148 = por %p146, %p147
      %p149 = scmp.ne.s32.totalorder %s141, %s143
      %p150 = scmp.eq.s32.totalorder %s28, 1
      %p151 = por %p149, %p150
      %p152 = scmp.ne.s32.totalorder %s143, %s144
      %p153 = scmp.eq.s32.totalorder %s28, 0
      %p154 = por %p152, %p153
      %p155 = scmp.ne.s32.totalorder %s143, %s144
      %p156 = scmp.eq.s32.totalorder %s29, 1
      %p157 = por %p155, %p156
      %p159 = scmp.ne.s32.totalorder %s144, %s158
      %p160 = scmp.eq.s32.totalorder %s29, 0
      %p161 = por %p159, %p160
      %s163 = sadd.s32 %s162, 1
      %p166 = scmp.eq.s32.totalorder %s23, 1
      %p167 = scmp.ne.s32.totalorder %s162, %s164
      %p168 = scmp.eq.s32.totalorder %s23, 0
      %p169 = por %p167, %p168
      %p170 = scmp.ne.s32.totalorder %s162, %s164
      %p171 = scmp.eq.s32.totalorder %s28, 1
      %p172 = por %p170, %p171
      %p173 = scmp.ne.s32.totalorder %s164, %s165
      %p174 = scmp.eq.s32.totalorder %s28, 0
      %p175 = por %p173, %p174
      %p176 = scmp.ne.s32.totalorder %s164, %s165
      %p177 = scmp.eq.s32.totalorder %s29, 1
      %p178 = por %p176, %p177
      %p180 = scmp.ne.s32.totalorder %s165, %s179
      %p181 = scmp.eq.s32.totalorder %s29, 0
      %p182 = por %p180, %p181
      %s184 = sadd.s32 %s183, 1
      %p187 = scmp.eq.s32.totalorder %s23, 1
      %p188 = scmp.ne.s32.totalorder %s183, %s185
      %p189 = scmp.eq.s32.totalorder %s23, 0
      %p190 = por %p188, %p189
      %p191 = scmp.ne.s32.totalorder %s183, %s185
      %p192 = scmp.eq.s32.totalorder %s28, 1
      %p193 = por %p191, %p192
      %p194 = scmp.ne.s32.totalorder %s185, %s186
      %p195 = scmp.eq.s32.totalorder %s28, 0
      %p196 = por %p194, %p195
      %p197 = scmp.ne.s32.totalorder %s185, %s186
      %p198 = scmp.eq.s32.totalorder %s29, 1
      %p199 = por %p197, %p198
      %p201 = scmp.ne.s32.totalorder %s186, %s200
      %p202 = scmp.eq.s32.totalorder %s29, 0
      %p203 = por %p201, %p202
      %s205 = sadd.s32 %s204, 1
      %p208 = scmp.eq.s32.totalorder %s23, 1
      %p209 = scmp.ne.s32.totalorder %s204, %s206
      %p210 = scmp.eq.s32.totalorder %s23, 0
      %p211 = por %p209, %p210
      %p212 = scmp.ne.s32.totalorder %s204, %s206
      %p213 = scmp.eq.s32.totalorder %s28, 1
      %p214 = por %p212, %p213
      %p215 = scmp.ne.s32.totalorder %s206, %s207
      %p216 = scmp.eq.s32.totalorder %s28, 0
      %p217 = por %p215, %p216
      %p218 = scmp.ne.s32.totalorder %s206, %s207
      %p219 = scmp.eq.s32.totalorder %s29, 1
      %p220 = por %p218, %p219
      %p222 = scmp.ne.s32.totalorder %s207, %s221
      %p223 = scmp.eq.s32.totalorder %s29, 0
      %p224 = por %p222, %p223
      %s225 = ssub.s32 %s23, %s30
      %p226 = scmp.eq.s32.totalorder %s225, 0
      %s228 = sadd.s32 %s227, 1
      %s229 = scalar_select %p226, %s227, %s228
      %p232 = pneg %p226
      %p233 = scmp.eq.s32.totalorder %s23, 1
      %p234 = por %p232, %p233
      %p235 = scmp.ne.s32.totalorder %s227, %s230
      %p236 = scmp.eq.s32.totalorder %s23, 0
      %p237 = por %p235, %p236
      %p238 = scmp.ne.s32.totalorder %s227, %s230
      %p239 = scmp.eq.s32.totalorder %s28, 1
      %p240 = por %p238, %p239
      %p241 = scmp.ne.s32.totalorder %s230, %s231
      %p242 = scmp.eq.s32.totalorder %s28, 0
      %p243 = por %p241, %p242
      %p244 = scmp.ne.s32.totalorder %s230, %s231
      %p245 = scmp.eq.s32.totalorder %s29, 1
      %p246 = por %p244, %p245
      %p248 = scmp.ne.s32.totalorder %s231, %s247
      %p249 = scmp.eq.s32.totalorder %s29, 0
      %p250 = por %p248, %p249
      %p251 = scmp.le.s32.totalorder 1, %s23
      %p252 = scmp.lt.s32.totalorder %s23, 3
      %p253 = pnand %p251, %p252
      %p254 = pneg %p253
      // Predicated region
      $region9: #{tpu_custom_call.1} parent=5 // pred_check
        _
      $region10: #{tpu_custom_call.1} parent=5 // pred_check_branch
        %256 = sbr.rel (%p253) target = $region12
      $region11: #{tpu_custom_call.1} parent=5 // pred_region
        %s257 = ssub.s32 %s23, 1
        // Predicated region
        $region13: #{tpu_custom_call.1} parent=11 // pred_check
          %p258 = pneg %p70
        $region14: #{tpu_custom_call.1} parent=11 // pred_check_branch
          %260 = sbr.rel (%p258) target = $region16
        $region15: #{tpu_custom_call.1} parent=11 // pred_region
          %s262 = ssub.s32 6272, 6272
          %263 = vsyncadd [#allocation6], %s262
          %s264 = sshll.u32 [#allocation5], 4
          %s265 = int_to_ptr.vmem [resolvable:$true] %s264
          %270 = dma.hbm_to_vmem [thread:$0]  %s1, 6272, %s265, [#allocation6], 64, 64, 4
        $region16: #{tpu_custom_call.1} parent=11 // pred_fallthru
          _
        // Predicated region
        $region17: #{tpu_custom_call.1} parent=11 // pred_check
          %p271 = pneg %p91
        $region18: #{tpu_custom_call.1} parent=11 // pred_check_branch
          %273 = sbr.rel (%p271) target = $region20
        $region19: #{tpu_custom_call.1} parent=11 // pred_region
          _
        $region20: #{tpu_custom_call.1} parent=11 // pred_fallthru
          _
        // Predicated region
        $region21: #{tpu_custom_call.1} parent=11 // pred_check
          %p274 = pneg %p112
        $region22: #{tpu_custom_call.1} parent=11 // pred_check_branch
          %276 = sbr.rel (%p274) target = $region24
        $region23: #{tpu_custom_call.1} parent=11 // pred_region
          %s278 = ssub.s32 1024, 1024
          %279 = vsyncadd [#allocation6], %s278
          %s280 = sshll.u32 [#allocation7], 4
          %s281 = int_to_ptr.vmem [resolvable:$true] %s280
          %286 = dma.hbm_to_vmem [thread:$0]  %s3, 1024, %s281, [#allocation6], 64, 64, 4
        $region24: #{tpu_custom_call.1} parent=11 // pred_fallthru
          _
        // Predicated region
        $region25: #{tpu_custom_call.1} parent=11 // pred_check
          %p287 = pneg %p133
        $region26: #{tpu_custom_call.1} parent=11 // pred_check_branch
          %289 = sbr.rel (%p287) target = $region28
        $region27: #{tpu_custom_call.1} parent=11 // pred_region
          _
        $region28: #{tpu_custom_call.1} parent=11 // pred_fallthru
          _
        // Predicated region
        $region29: #{tpu_custom_call.1} parent=11 // pred_check
          %p290 = pneg %p154
        $region30: #{tpu_custom_call.1} parent=11 // pred_check_branch
          %292 = sbr.rel (%p290) target = $region32
        $region31: #{tpu_custom_call.1} parent=11 // pred_region
          %s294 = ssub.s32 1024, 1024
          %295 = vsyncadd [#allocation9], %s294
          %s296 = sshll.u32 [#allocation8], 4
          %s297 = int_to_ptr.vmem [resolvable:$true] %s296
          %302 = dma.hbm_to_vmem [thread:$0]  %s5, 1024, %s297, [#allocation9], 64, 64, 4
        $region32: #{tpu_custom_call.1} parent=11 // pred_fallthru
          _
        // Predicated region
        $region33: #{tpu_custom_call.1} parent=11 // pred_check
          %p303 = pneg %p175
        $region34: #{tpu_custom_call.1} parent=11 // pred_check_branch
          %305 = sbr.rel (%p303) target = $region36
        $region35: #{tpu_custom_call.1} parent=11 // pred_region
          _
        $region36: #{tpu_custom_call.1} parent=11 // pred_fallthru
          _
        // Predicated region
        $region37: #{tpu_custom_call.1} parent=11 // pred_check
          %p306 = pneg %p196
        $region38: #{tpu_custom_call.1} parent=11 // pred_check_branch
          %308 = sbr.rel (%p306) target = $region40
        $region39: #{tpu_custom_call.1} parent=11 // pred_region
          %s310 = ssub.s32 1024, 1024
          %311 = vsyncadd [#allocation9], %s310
          %s312 = sshll.u32 [#allocation10], 4
          %s313 = int_to_ptr.vmem [resolvable:$true] %s312
          %318 = dma.hbm_to_vmem [thread:$0]  %s7, 1024, %s313, [#allocation9], 64, 64, 4
        $region40: #{tpu_custom_call.1} parent=11 // pred_fallthru
          _
        // Predicated region
        $region41: #{tpu_custom_call.1} parent=11 // pred_check
          %p319 = pneg %p217
        $region42: #{tpu_custom_call.1} parent=11 // pred_check_branch
          %321 = sbr.rel (%p319) target = $region44
        $region43: #{tpu_custom_call.1} parent=11 // pred_region
          _
        $region44: #{tpu_custom_call.1} parent=11 // pred_fallthru
          _
      $region12: #{tpu_custom_call.1} parent=5 // pred_fallthru
        _
      %p322 = scmp.lt.s32.totalorder %s23, 2
      // Predicated region
      $region45: #{tpu_custom_call.1} parent=5 // pred_check
        %p323 = pneg %p322
      $region46: #{tpu_custom_call.1} parent=5 // pred_check_branch
        %325 = sbr.rel (%p323) target = $region48
      $region47: #{tpu_custom_call.1} parent=5 // pred_region
        // Predicated region
        $region49: #{tpu_custom_call.1} parent=47 // pred_check
          %p326 = pneg %p43
        $region50: #{tpu_custom_call.1} parent=47 // pred_check_branch
          %328 = sbr.rel (%p326) target = $region52
        $region51: #{tpu_custom_call.1} parent=47 // pred_region
          %s329 = sand.u32 %s33, 1
          %s330 = scalar_lea.sflag [#allocation3], %s329
          %s331 = sand.u32 %s33, 1
          %s332 = smul.addr %s331, 784
          %s333 = scalar_lea.vmem [#allocation2], %s332
          %s334 = smul.u32 14, %s23
          %s336 = ssub.s32 12544, 12544
          %337 = vsyncadd %s330, %s336
          %s338 = smul.addr %s334, 7
          %s339 = smul.addr %s338, 128
          %s340 = scalar_lea.hbm %s0, %s339
          %s341 = sshll.u32 %s333, 4
          %s342 = int_to_ptr.vmem [resolvable:$true] %s341
          %347 = dma.hbm_to_vmem [thread:$0]  %s340, 12544, %s342, %s330, 896, 896, 56
        $region52: #{tpu_custom_call.1} parent=47 // pred_fallthru
          _
      $region48: #{tpu_custom_call.1} parent=5 // pred_fallthru
        _
      %p348 = scmp.le.s32.totalorder 1, %s23
      %p349 = scmp.lt.s32.totalorder %s23, 3
      %p350 = pnand %p348, %p349
      %p351 = pneg %p350
      // Predicated region
      $region53: #{tpu_custom_call.1} parent=5 // pred_check
        _
      $region54: #{tpu_custom_call.1} parent=5 // pred_check_branch
        %353 = sbr.rel (%p350) target = $region56
      $region55: #{tpu_custom_call.1} parent=5 // pred_region
        %s354 = ssub.s32 %s23, 1
        %s355 = sand.u32 %s36, 1
        %s356 = scalar_lea.sflag [#allocation3], %s355
        %s357 = sand.u32 %s36, 1
        %s358 = smul.addr %s357, 784
        %s359 = scalar_lea.vmem [#allocation2], %s358
        // Predicated region
        $region57: #{tpu_custom_call.1} parent=55 // pred_check
          %p360 = pneg %p49
        $region58: #{tpu_custom_call.1} parent=55 // pred_check_branch
          %362 = sbr.rel (%p360) target = $region60
        $region59: #{tpu_custom_call.1} parent=55 // pred_region
          %363 = dma.done %s356, 12544
        $region60: #{tpu_custom_call.1} parent=55 // pred_fallthru
          _
        // Predicated region
        $region61: #{tpu_custom_call.1} parent=55 // pred_check
          %p364 = pneg %p70
        $region62: #{tpu_custom_call.1} parent=55 // pred_check_branch
          %366 = sbr.rel (%p364) target = $region64
        $region63: #{tpu_custom_call.1} parent=55 // pred_region
          %367 = dma.done [#allocation6], 6272
        $region64: #{tpu_custom_call.1} parent=55 // pred_fallthru
          _
        // Predicated region
        $region65: #{tpu_custom_call.1} parent=55 // pred_check
          %p368 = pneg %p112
        $region66: #{tpu_custom_call.1} parent=55 // pred_check_branch
          %370 = sbr.rel (%p368) target = $region68
        $region67: #{tpu_custom_call.1} parent=55 // pred_region
          %371 = dma.done [#allocation6], 1024
        $region68: #{tpu_custom_call.1} parent=55 // pred_fallthru
          _
        // Predicated region
        $region69: #{tpu_custom_call.1} parent=55 // pred_check
          %p372 = pneg %p154
        $region70: #{tpu_custom_call.1} parent=55 // pred_check_branch
          %374 = sbr.rel (%p372) target = $region72
        $region71: #{tpu_custom_call.1} parent=55 // pred_region
          %375 = dma.done [#allocation9], 1024
        $region72: #{tpu_custom_call.1} parent=55 // pred_fallthru
          _
        // Predicated region
        $region73: #{tpu_custom_call.1} parent=55 // pred_check
          %p376 = pneg %p196
        $region74: #{tpu_custom_call.1} parent=55 // pred_check_branch
          %378 = sbr.rel (%p376) target = $region76
        $region75: #{tpu_custom_call.1} parent=55 // pred_region
          %379 = dma.done [#allocation9], 1024
        $region76: #{tpu_custom_call.1} parent=55 // pred_fallthru
          _
        %s380 = sand.u32 %s36, 1
        %s381 = scalar_lea.sflag [#allocation3], %s380
        %s382 = sand.u32 %s36, 1
        %s383 = smul.addr %s382, 784
        %s384 = scalar_lea.vmem [#allocation2], %s383
        %p385 = pneg %p49
        %p386 = pneg %p46
        %p387 = pneg %p70
        %p388 = pneg %p67
        %p389 = pneg %p91
        %p390 = pneg %p88
        %p391 = pneg %p112
        %p392 = pneg %p109
        %p393 = pneg %p133
        %p394 = pneg %p130
        %p395 = pneg %p154
        %p396 = pneg %p151
        %p397 = pneg %p175
        %p398 = pneg %p172
        %p399 = pneg %p196
        %p400 = pneg %p193
        %p401 = pneg %p217
        %p402 = pneg %p214
        %p403 = pneg %p243
        %p404 = pneg %p240
        %s405 = sand.u32 %s230, 1
        %s406 = scalar_lea.sflag [#allocation4], %s405
        %s407 = sand.u32 %s230, 1
        %s408 = smul.addr %s407, 56
        %s409 = scalar_lea.vmem [#allocation11], %s408
        %s410 = smul.u32 14, %s28
        %s411 = smul.u32 14, %s28
        %v413 = vld [vmem:[%s359] sm:$0xff]
        %v414 = vld [vmem:[%s359 + $0x8] sm:$0xff]
        %v415 = vld [vmem:[%s359 + $0x10] sm:$0xff]
        %v416 = vld [vmem:[%s359 + $0x18] sm:$0xff]
        %v417 = vld [vmem:[%s359 + $0x20] sm:$0xff]
        %v418 = vld [vmem:[%s359 + $0x28] sm:$0xff]
        %v419 = vld [vmem:[%s359 + $0x30] sm:$0xff]
        %v420 = vld [vmem:[%s359 + $0x38] sm:$0xff]
        %v421 = vld [vmem:[%s359 + $0x40] sm:$0xff]
        %v422 = vld [vmem:[%s359 + $0x48] sm:$0xff]
        %v423 = vld [vmem:[%s359 + $0x50] sm:$0xff]
        %v424 = vld [vmem:[%s359 + $0x58] sm:$0xff]
        %v425 = vld [vmem:[%s359 + $0x60] sm:$0xff]
        %v426 = vld [vmem:[%s359 + $0x68] sm:$0xff]
        %v427 = vld [vmem:[%s359 + $0x70] sm:$0xff]
        %v428 = vld [vmem:[%s359 + $0x78] sm:$0xff]
        %v429 = vld [vmem:[%s359 + $0x80] sm:$0xff]
        %v430 = vld [vmem:[%s359 + $0x88] sm:$0xff]
        %v431 = vld [vmem:[%s359 + $0x90] sm:$0xff]
        %v432 = vld [vmem:[%s359 + $0x98] sm:$0xff]
        %v433 = vld [vmem:[%s359 + $0xa0] sm:$0xff]
        %v434 = vld [vmem:[%s359 + $0xa8] sm:$0xff]
        %v435 = vld [vmem:[%s359 + $0xb0] sm:$0xff]
        %v436 = vld [vmem:[%s359 + $0xb8] sm:$0xff]
        %v437 = vld [vmem:[%s359 + $0xc0] sm:$0xff]
        %v438 = vld [vmem:[%s359 + $0xc8] sm:$0xff]
        %v439 = vld [vmem:[%s359 + $0xd0] sm:$0xff]
        %v440 = vld [vmem:[%s359 + $0xd8] sm:$0xff]
        %v441 = vld [vmem:[%s359 + $0xe0] sm:$0xff]
        %v442 = vld [vmem:[%s359 + $0xe8] sm:$0xff]
        %v443 = vld [vmem:[%s359 + $0xf0] sm:$0xff]
        %v444 = vld [vmem:[%s359 + $0xf8] sm:$0xff]
        %v445 = vld [vmem:[%s359 + $0x100] sm:$0xff]
        %v446 = vld [vmem:[%s359 + $0x108] sm:$0xff]
        %v447 = vld [vmem:[%s359 + $0x110] sm:$0xff]
        %v448 = vld [vmem:[%s359 + $0x118] sm:$0xff]
        %v449 = vld [vmem:[%s359 + $0x120] sm:$0xff]
        %v450 = vld [vmem:[%s359 + $0x128] sm:$0xff]
        %v451 = vld [vmem:[%s359 + $0x130] sm:$0xff]
        %v452 = vld [vmem:[%s359 + $0x138] sm:$0xff]
        %v453 = vld [vmem:[%s359 + $0x140] sm:$0xff]
        %v454 = vld [vmem:[%s359 + $0x148] sm:$0xff]
        %v455 = vld [vmem:[%s359 + $0x150] sm:$0xff]
        %v456 = vld [vmem:[%s359 + $0x158] sm:$0xff]
        %v457 = vld [vmem:[%s359 + $0x160] sm:$0xff]
        %v458 = vld [vmem:[%s359 + $0x168] sm:$0xff]
        %v459 = vld [vmem:[%s359 + $0x170] sm:$0xff]
        %v460 = vld [vmem:[%s359 + $0x178] sm:$0xff]
        %v461 = vld [vmem:[%s359 + $0x180] sm:$0xff]
        %v462 = vld [vmem:[%s359 + $0x188] sm:$0xff]
        %v463 = vld [vmem:[%s359 + $0x190] sm:$0xff]
        %v464 = vld [vmem:[%s359 + $0x198] sm:$0xff]
        %v465 = vld [vmem:[%s359 + $0x1a0] sm:$0xff]
        %v466 = vld [vmem:[%s359 + $0x1a8] sm:$0xff]
        %v467 = vld [vmem:[%s359 + $0x1b0] sm:$0xff]
        %v468 = vld [vmem:[%s359 + $0x1b8] sm:$0xff]
        %v469 = vld [vmem:[%s359 + $0x1c0] sm:$0xff]
        %v470 = vld [vmem:[%s359 + $0x1c8] sm:$0xff]
        %v471 = vld [vmem:[%s359 + $0x1d0] sm:$0xff]
        %v472 = vld [vmem:[%s359 + $0x1d8] sm:$0xff]
        %v473 = vld [vmem:[%s359 + $0x1e0] sm:$0xff]
        %v474 = vld [vmem:[%s359 + $0x1e8] sm:$0xff]
        %v475 = vld [vmem:[%s359 + $0x1f0] sm:$0xff]
        %v476 = vld [vmem:[%s359 + $0x1f8] sm:$0xff]
        %v477 = vld [vmem:[%s359 + $0x200] sm:$0xff]
        %v478 = vld [vmem:[%s359 + $0x208] sm:$0xff]
        %v479 = vld [vmem:[%s359 + $0x210] sm:$0xff]
        %v480 = vld [vmem:[%s359 + $0x218] sm:$0xff]
        %v481 = vld [vmem:[%s359 + $0x220] sm:$0xff]
        %v482 = vld [vmem:[%s359 + $0x228] sm:$0xff]
        %v483 = vld [vmem:[%s359 + $0x230] sm:$0xff]
        %v484 = vld [vmem:[%s359 + $0x238] sm:$0xff]
        %v485 = vld [vmem:[%s359 + $0x240] sm:$0xff]
        %v486 = vld [vmem:[%s359 + $0x248] sm:$0xff]
        %v487 = vld [vmem:[%s359 + $0x250] sm:$0xff]
        %v488 = vld [vmem:[%s359 + $0x258] sm:$0xff]
        %v489 = vld [vmem:[%s359 + $0x260] sm:$0xff]
        %v490 = vld [vmem:[%s359 + $0x268] sm:$0xff]
        %v491 = vld [vmem:[%s359 + $0x270] sm:$0xff]
        %v492 = vld [vmem:[%s359 + $0x278] sm:$0xff]
        %v493 = vld [vmem:[%s359 + $0x280] sm:$0xff]
        %v494 = vld [vmem:[%s359 + $0x288] sm:$0xff]
        %v495 = vld [vmem:[%s359 + $0x290] sm:$0xff]
        %v496 = vld [vmem:[%s359 + $0x298] sm:$0xff]
        %v497 = vld [vmem:[%s359 + $0x2a0] sm:$0xff]
        %v498 = vld [vmem:[%s359 + $0x2a8] sm:$0xff]
        %v499 = vld [vmem:[%s359 + $0x2b0] sm:$0xff]
        %v500 = vld [vmem:[%s359 + $0x2b8] sm:$0xff]
        %v501 = vld [vmem:[%s359 + $0x2c0] sm:$0xff]
        %v502 = vld [vmem:[%s359 + $0x2c8] sm:$0xff]
        %v503 = vld [vmem:[%s359 + $0x2d0] sm:$0xff]
        %v504 = vld [vmem:[%s359 + $0x2d8] sm:$0xff]
        %v505 = vld [vmem:[%s359 + $0x2e0] sm:$0xff]
        %v506 = vld [vmem:[%s359 + $0x2e8] sm:$0xff]
        %v507 = vld [vmem:[%s359 + $0x2f0] sm:$0xff]
        %v508 = vld [vmem:[%s359 + $0x2f8] sm:$0xff]
        %v509 = vld [vmem:[%s359 + $0x300] sm:$0xff]
        %v510 = vld [vmem:[%s359 + $0x308] sm:$0xff]
        %v511 = vpack.c.bf16 %v420, %v413
        %v512 = vpack.c.bf16 %v421, %v414
        %v513 = vpack.c.bf16 %v422, %v415
        %v514 = vpack.c.bf16 %v423, %v416
        %v515 = vpack.c.bf16 %v424, %v417
        %v516 = vpack.c.bf16 %v425, %v418
        %v517 = vpack.c.bf16 %v426, %v419
        %v518 = vpack.c.bf16 %v434, %v427
        %v519 = vpack.c.bf16 %v435, %v428
        %v520 = vpack.c.bf16 %v436, %v429
        %v521 = vpack.c.bf16 %v437, %v430
        %v522 = vpack.c.bf16 %v438, %v431
        %v523 = vpack.c.bf16 %v439, %v432
        %v524 = vpack.c.bf16 %v440, %v433
        %v525 = vpack.c.bf16 %v448, %v441
        %v526 = vpack.c.bf16 %v449, %v442
        %v527 = vpack.c.bf16 %v450, %v443
        %v528 = vpack.c.bf16 %v451, %v444
        %v529 = vpack.c.bf16 %v452, %v445
        %v530 = vpack.c.bf16 %v453, %v446
        %v531 = vpack.c.bf16 %v454, %v447
        %v532 = vpack.c.bf16 %v462, %v455
        %v533 = vpack.c.bf16 %v463, %v456
        %v534 = vpack.c.bf16 %v464, %v457
        %v535 = vpack.c.bf16 %v465, %v458
        %v536 = vpack.c.bf16 %v466, %v459
        %v537 = vpack.c.bf16 %v467, %v460
        %v538 = vpack.c.bf16 %v468, %v461
        %v539 = vpack.c.bf16 %v476, %v469
        %v540 = vpack.c.bf16 %v477, %v470
        %v541 = vpack.c.bf16 %v478, %v471
        %v542 = vpack.c.bf16 %v479, %v472
        %v543 = vpack.c.bf16 %v480, %v473
        %v544 = vpack.c.bf16 %v481, %v474
        %v545 = vpack.c.bf16 %v482, %v475
        %v546 = vpack.c.bf16 %v490, %v483
        %v547 = vpack.c.bf16 %v491, %v484
        %v548 = vpack.c.bf16 %v492, %v485
        %v549 = vpack.c.bf16 %v493, %v486
        %v550 = vpack.c.bf16 %v494, %v487
        %v551 = vpack.c.bf16 %v495, %v488
        %v552 = vpack.c.bf16 %v496, %v489
        %v553 = vpack.c.bf16 %v504, %v497
        %v554 = vpack.c.bf16 %v505, %v498
        %v555 = vpack.c.bf16 %v506, %v499
        %v556 = vpack.c.bf16 %v507, %v500
        %v557 = vpack.c.bf16 %v508, %v501
        %v558 = vpack.c.bf16 %v509, %v502
        %v559 = vpack.c.bf16 %v510, %v503
        %v560 = vld [vmem:[#allocation5] sm:$0xf]
        %v561 = vld [vmem:[#allocation5 + $0x4] sm:$0xf]
        %v562 = vld [vmem:[#allocation5 + $0x8] sm:$0xf]
        %v563 = vld [vmem:[#allocation5 + $0xc] sm:$0xf]
        %v564 = vld [vmem:[#allocation5 + $0x10] sm:$0xf]
        %v565 = vld [vmem:[#allocation5 + $0x14] sm:$0xf]
        %v566 = vld [vmem:[#allocation5 + $0x18] sm:$0xf]
        %v567 = vld [vmem:[#allocation5 + $0x1c] sm:$0xf]
        %v568 = vld [vmem:[#allocation5 + $0x20] sm:$0xf]
        %v569 = vld [vmem:[#allocation5 + $0x24] sm:$0xf]
        %v570 = vld [vmem:[#allocation5 + $0x28] sm:$0xf]
        %v571 = vld [vmem:[#allocation5 + $0x2c] sm:$0xf]
        %v572 = vld [vmem:[#allocation5 + $0x30] sm:$0xf]
        %v573 = vld [vmem:[#allocation5 + $0x34] sm:$0xf]
        %v574 = vld [vmem:[#allocation5 + $0x38] sm:$0xf]
        %v575 = vld [vmem:[#allocation5 + $0x3c] sm:$0xf]
        %v576 = vld [vmem:[#allocation5 + $0x40] sm:$0xf]
        %v577 = vld [vmem:[#allocation5 + $0x44] sm:$0xf]
        %v578 = vld [vmem:[#allocation5 + $0x48] sm:$0xf]
        %v579 = vld [vmem:[#allocation5 + $0x4c] sm:$0xf]
        %v580 = vld [vmem:[#allocation5 + $0x50] sm:$0xf]
        %v581 = vld [vmem:[#allocation5 + $0x54] sm:$0xf]
        %v582 = vld [vmem:[#allocation5 + $0x58] sm:$0xf]
        %v583 = vld [vmem:[#allocation5 + $0x5c] sm:$0xf]
        %v584 = vld [vmem:[#allocation5 + $0x60] sm:$0xf]
        %v585 = vld [vmem:[#allocation5 + $0x64] sm:$0xf]
        %v586 = vld [vmem:[#allocation5 + $0x68] sm:$0xf]
        %v587 = vld [vmem:[#allocation5 + $0x6c] sm:$0xf]
        %v588 = vld [vmem:[#allocation5 + $0x70] sm:$0xf]
        %v589 = vld [vmem:[#allocation5 + $0x74] sm:$0xf]
        %v590 = vld [vmem:[#allocation5 + $0x78] sm:$0xf]
        %v591 = vld [vmem:[#allocation5 + $0x7c] sm:$0xf]
        %v592 = vld [vmem:[#allocation5 + $0x80] sm:$0xf]
        %v593 = vld [vmem:[#allocation5 + $0x84] sm:$0xf]
        %v594 = vld [vmem:[#allocation5 + $0x88] sm:$0xf]
        %v595 = vld [vmem:[#allocation5 + $0x8c] sm:$0xf]
        %v596 = vld [vmem:[#allocation5 + $0x90] sm:$0xf]
        %v597 = vld [vmem:[#allocation5 + $0x94] sm:$0xf]
        %v598 = vld [vmem:[#allocation5 + $0x98] sm:$0xf]
        %v599 = vld [vmem:[#allocation5 + $0x9c] sm:$0xf]
        %v600 = vld [vmem:[#allocation5 + $0xa0] sm:$0xf]
        %v601 = vld [vmem:[#allocation5 + $0xa4] sm:$0xf]
        %v602 = vld [vmem:[#allocation5 + $0xa8] sm:$0xf]
        %v603 = vld [vmem:[#allocation5 + $0xac] sm:$0xf]
        %v604 = vld [vmem:[#allocation5 + $0xb0] sm:$0xf]
        %v605 = vld [vmem:[#allocation5 + $0xb4] sm:$0xf]
        %v606 = vld [vmem:[#allocation5 + $0xb8] sm:$0xf]
        %v607 = vld [vmem:[#allocation5 + $0xbc] sm:$0xf]
        %v608 = vld [vmem:[#allocation5 + $0xc0] sm:$0xf]
        %v609 = vld [vmem:[#allocation5 + $0xc4] sm:$0xf]
        %v610 = vld [vmem:[#allocation5 + $0xc8] sm:$0xf]
        %v611 = vld [vmem:[#allocation5 + $0xcc] sm:$0xf]
        %v612 = vld [vmem:[#allocation5 + $0xd0] sm:$0xf]
        %v613 = vld [vmem:[#allocation5 + $0xd4] sm:$0xf]
        %v614 = vld [vmem:[#allocation5 + $0xd8] sm:$0xf]
        %v615 = vld [vmem:[#allocation5 + $0xdc] sm:$0xf]
        %v616 = vld [vmem:[#allocation5 + $0xe0] sm:$0xf]
        %v617 = vld [vmem:[#allocation5 + $0xe4] sm:$0xf]
        %v618 = vld [vmem:[#allocation5 + $0xe8] sm:$0xf]
        %v619 = vld [vmem:[#allocation5 + $0xec] sm:$0xf]
        %v620 = vld [vmem:[#allocation5 + $0xf0] sm:$0xf]
        %v621 = vld [vmem:[#allocation5 + $0xf4] sm:$0xf]
        %v622 = vld [vmem:[#allocation5 + $0xf8] sm:$0xf]
        %v623 = vld [vmem:[#allocation5 + $0xfc] sm:$0xf]
        %v624 = vld [vmem:[#allocation5 + $0x100] sm:$0xf]
        %v625 = vld [vmem:[#allocation5 + $0x104] sm:$0xf]
        %v626 = vld [vmem:[#allocation5 + $0x108] sm:$0xf]
        %v627 = vld [vmem:[#allocation5 + $0x10c] sm:$0xf]
        %v628 = vld [vmem:[#allocation5 + $0x110] sm:$0xf]
        %v629 = vld [vmem:[#allocation5 + $0x114] sm:$0xf]
        %v630 = vld [vmem:[#allocation5 + $0x118] sm:$0xf]
        %v631 = vld [vmem:[#allocation5 + $0x11c] sm:$0xf]
        %v632 = vld [vmem:[#allocation5 + $0x120] sm:$0xf]
        %v633 = vld [vmem:[#allocation5 + $0x124] sm:$0xf]
        %v634 = vld [vmem:[#allocation5 + $0x128] sm:$0xf]
        %v635 = vld [vmem:[#allocation5 + $0x12c] sm:$0xf]
        %v636 = vld [vmem:[#allocation5 + $0x130] sm:$0xf]
        %v637 = vld [vmem:[#allocation5 + $0x134] sm:$0xf]
        %v638 = vld [vmem:[#allocation5 + $0x138] sm:$0xf]
        %v639 = vld [vmem:[#allocation5 + $0x13c] sm:$0xf]
        %v640 = vld [vmem:[#allocation5 + $0x140] sm:$0xf]
        %v641 = vld [vmem:[#allocation5 + $0x144] sm:$0xf]
        %v642 = vld [vmem:[#allocation5 + $0x148] sm:$0xf]
        %v643 = vld [vmem:[#allocation5 + $0x14c] sm:$0xf]
        %v644 = vld [vmem:[#allocation5 + $0x150] sm:$0xf]
        %v645 = vld [vmem:[#allocation5 + $0x154] sm:$0xf]
        %v646 = vld [vmem:[#allocation5 + $0x158] sm:$0xf]
        %v647 = vld [vmem:[#allocation5 + $0x15c] sm:$0xf]
        %v648 = vld [vmem:[#allocation5 + $0x160] sm:$0xf]
        %v649 = vld [vmem:[#allocation5 + $0x164] sm:$0xf]
        %v650 = vld [vmem:[#allocation5 + $0x168] sm:$0xf]
        %v651 = vld [vmem:[#allocation5 + $0x16c] sm:$0xf]
        %v652 = vld [vmem:[#allocation5 + $0x170] sm:$0xf]
        %v653 = vld [vmem:[#allocation5 + $0x174] sm:$0xf]
        %v654 = vld [vmem:[#allocation5 + $0x178] sm:$0xf]
        %v655 = vld [vmem:[#allocation5 + $0x17c] sm:$0xf]
        %v656 = vld [vmem:[#allocation5 + $0x180] sm:$0xf]
        %v657 = vld [vmem:[#allocation5 + $0x184] sm:$0xf]
        %v658 = vld [vmem:[%s2] sm:$0x1]
        %v660 = vlaneseq
        %v661 = vshrl.u32 %v660, 7
        %v662 = vsub.s32 0, %v661
        %v663 = vrot.slane %v658, %v662
        %v763 = vunpack.c.l.b16 %v560
        %v764 = vunpack.c.l.b16 %v561
        %v765 = vunpack.c.l.b16 %v562
        %v766 = vunpack.c.l.b16 %v563
        %v767 = vunpack.c.l.b16 %v564
        %v768 = vunpack.c.l.b16 %v565
        %v769 = vunpack.c.l.b16 %v566
        %v770 = vunpack.c.l.b16 %v567
        %v771 = vunpack.c.l.b16 %v568
        %v772 = vunpack.c.l.b16 %v569
        %v773 = vunpack.c.l.b16 %v570
        %v774 = vunpack.c.l.b16 %v571
        %v775 = vunpack.c.l.b16 %v572
        %v776 = vunpack.c.l.b16 %v573
        %v777 = vunpack.c.l.b16 %v574
        %v778 = vunpack.c.l.b16 %v575
        %v779 = vunpack.c.l.b16 %v576
        %v780 = vunpack.c.l.b16 %v577
        %v781 = vunpack.c.l.b16 %v578
        %v782 = vunpack.c.l.b16 %v579
        %v783 = vunpack.c.l.b16 %v580
        %v784 = vunpack.c.l.b16 %v581
        %v785 = vunpack.c.l.b16 %v582
        %v786 = vunpack.c.l.b16 %v583
        %v787 = vunpack.c.l.b16 %v584
        %v788 = vunpack.c.l.b16 %v585
        %v789 = vunpack.c.l.b16 %v586
        %v790 = vunpack.c.l.b16 %v587
        %v791 = vunpack.c.l.b16 %v588
        %v792 = vunpack.c.l.b16 %v589
        %v793 = vunpack.c.l.b16 %v590
        %v794 = vunpack.c.l.b16 %v591
        %v795 = vunpack.c.l.b16 %v592
        %v796 = vunpack.c.l.b16 %v593
        %v797 = vunpack.c.l.b16 %v594
        %v798 = vunpack.c.l.b16 %v595
        %v799 = vunpack.c.l.b16 %v596
        %v800 = vunpack.c.l.b16 %v597
        %v801 = vunpack.c.l.b16 %v598
        %v802 = vunpack.c.l.b16 %v599
        %v803 = vunpack.c.l.b16 %v600
        %v804 = vunpack.c.l.b16 %v601
        %v805 = vunpack.c.l.b16 %v602
        %v806 = vunpack.c.l.b16 %v603
        %v807 = vunpack.c.l.b16 %v604
        %v808 = vunpack.c.l.b16 %v605
        %v809 = vunpack.c.l.b16 %v606
        %v810 = vunpack.c.l.b16 %v607
        %v811 = vunpack.c.l.b16 %v608
        %v812 = vunpack.c.l.b16 %v609
        %v813 = vunpack.c.l.b16 %v610
        %v814 = vunpack.c.l.b16 %v611
        %v815 = vunpack.c.l.b16 %v612
        %v816 = vunpack.c.l.b16 %v613
        %v817 = vunpack.c.l.b16 %v614
        %v818 = vunpack.c.l.b16 %v615
        %v819 = vunpack.c.l.b16 %v616
        %v820 = vunpack.c.l.b16 %v617
        %v821 = vunpack.c.l.b16 %v618
        %v822 = vunpack.c.l.b16 %v619
        %v823 = vunpack.c.l.b16 %v620
        %v824 = vunpack.c.l.b16 %v621
        %v825 = vunpack.c.l.b16 %v622
        %v826 = vunpack.c.l.b16 %v623
        %v827 = vunpack.c.l.b16 %v624
        %v828 = vunpack.c.l.b16 %v625
        %v829 = vunpack.c.l.b16 %v626
        %v830 = vunpack.c.l.b16 %v627
        %v831 = vunpack.c.l.b16 %v628
        %v832 = vunpack.c.l.b16 %v629
        %v833 = vunpack.c.l.b16 %v630
        %v834 = vunpack.c.l.b16 %v631
        %v835 = vunpack.c.l.b16 %v632
        %v836 = vunpack.c.l.b16 %v633
        %v837 = vunpack.c.l.b16 %v634
        %v838 = vunpack.c.l.b16 %v635
        %v839 = vunpack.c.l.b16 %v636
        %v840 = vunpack.c.l.b16 %v637
        %v841 = vunpack.c.l.b16 %v638
        %v842 = vunpack.c.l.b16 %v639
        %v843 = vunpack.c.l.b16 %v640
        %v844 = vunpack.c.l.b16 %v641
        %v845 = vunpack.c.l.b16 %v642
        %v846 = vunpack.c.l.b16 %v643
        %v847 = vunpack.c.l.b16 %v644
        %v848 = vunpack.c.l.b16 %v645
        %v849 = vunpack.c.l.b16 %v646
        %v850 = vunpack.c.l.b16 %v647
        %v851 = vunpack.c.l.b16 %v648
        %v852 = vunpack.c.l.b16 %v649
        %v853 = vunpack.c.l.b16 %v650
        %v854 = vunpack.c.l.b16 %v651
        %v855 = vunpack.c.l.b16 %v652
        %v856 = vunpack.c.l.b16 %v653
        %v857 = vunpack.c.l.b16 %v654
        %v858 = vunpack.c.l.b16 %v655
        %v859 = vunpack.c.l.b16 %v656
        %v860 = vunpack.c.l.b16 %v657
        %v861 = vpack.c.b16 %v764, %v763
        %v862 = vpack.c.b16 %v766, %v765
        %v863 = vpack.c.b16 %v768, %v767
        %v864 = vpack.c.b16 %v770, %v769
        %v865 = vpack.c.b16 %v772, %v771
        %v866 = vpack.c.b16 %v774, %v773
        %v867 = vpack.c.b16 %v776, %v775
        %v868 = vpack.c.b16 %v778, %v777
        %v869 = vpack.c.b16 %v780, %v779
        %v870 = vpack.c.b16 %v782, %v781
        %v871 = vpack.c.b16 %v784, %v783
        %v872 = vpack.c.b16 %v786, %v785
        %v873 = vpack.c.b16 %v788, %v787
        %v874 = vpack.c.b16 %v790, %v789
        %v875 = vpack.c.b16 %v792, %v791
        %v876 = vpack.c.b16 %v794, %v793
        %v877 = vpack.c.b16 %v796, %v795
        %v878 = vpack.c.b16 %v798, %v797
        %v879 = vpack.c.b16 %v800, %v799
        %v880 = vpack.c.b16 %v802, %v801
        %v881 = vpack.c.b16 %v804, %v803
        %v882 = vpack.c.b16 %v806, %v805
        %v883 = vpack.c.b16 %v808, %v807
        %v884 = vpack.c.b16 %v810, %v809
        %v885 = vpack.c.b16 %v812, %v811
        %v886 = vpack.c.b16 %v814, %v813
        %v887 = vpack.c.b16 %v816, %v815
        %v888 = vpack.c.b16 %v818, %v817
        %v889 = vpack.c.b16 %v820, %v819
        %v890 = vpack.c.b16 %v822, %v821
        %v891 = vpack.c.b16 %v824, %v823
        %v892 = vpack.c.b16 %v826, %v825
        %v893 = vpack.c.b16 %v828, %v827
        %v894 = vpack.c.b16 %v830, %v829
        %v895 = vpack.c.b16 %v832, %v831
        %v896 = vpack.c.b16 %v834, %v833
        %v897 = vpack.c.b16 %v836, %v835
        %v898 = vpack.c.b16 %v838, %v837
        %v899 = vpack.c.b16 %v840, %v839
        %v900 = vpack.c.b16 %v842, %v841
        %v901 = vpack.c.b16 %v844, %v843
        %v902 = vpack.c.b16 %v846, %v845
        %v903 = vpack.c.b16 %v848, %v847
        %v904 = vpack.c.b16 %v850, %v849
        %v905 = vpack.c.b16 %v852, %v851
        %v906 = vpack.c.b16 %v854, %v853
        %v907 = vpack.c.b16 %v856, %v855
        %v908 = vpack.c.b16 %v858, %v857
        %v909 = vpack.c.b16 %v860, %v859
        %vm959 = vcmask 130048
        %v961 = vsel %vm959, %v517, 0
        %v964 = vsel %vm959, %v524, 0
        %v967 = vsel %vm959, %v531, 0
        %v970 = vsel %vm959, %v538, 0
        %v973 = vsel %vm959, %v545, 0
        %v976 = vsel %vm959, %v552, 0
        %v979 = vsel %vm959, %v559, 0
        %981 = vmatprep.subr.bf16.mxu0 0
        %982 = vmatpush1.bf16.msra.mxu0 %v861
        %983 = vmatprep.subr.bf16.mxu0 0
        %984 = vmatpush1.bf16.msra.mxu0 %v862
        %985 = vmatprep.subr.bf16.mxu0 0
        %986 = vmatpush1.bf16.msra.mxu0 %v863
        %987 = vmatprep.subr.bf16.mxu0 0
        %988 = vmatpush1.bf16.msra.mxu0 %v864
        %989 = vmatprep.subr.bf16.mxu0 0
        %990 = vmatpush1.bf16.msra.mxu0 %v865
        %991 = vmatprep.subr.bf16.mxu0 0
        %992 = vmatpush1.bf16.msra.mxu0 %v866
        %993 = vmatprep.subr.bf16.mxu0 0
        %994 = vmatpush1.bf16.msra.mxu0 %v867
        %995 = vmatprep.subr.bf16.mxu0 0
        %996 = vmatpush1.bf16.msra.mxu0 %v868
        %997 = vmatprep.subr.bf16.mxu0 0
        %998 = vmatpush1.bf16.msra.mxu0 %v869
        %999 = vmatprep.subr.bf16.mxu0 0
        %1000 = vmatpush1.bf16.msra.mxu0 %v870
        %1001 = vmatprep.subr.bf16.mxu0 0
        %1002 = vmatpush1.bf16.msra.mxu0 %v871
        %1003 = vmatprep.subr.bf16.mxu0 0
        %1004 = vmatpush1.bf16.msra.mxu0 %v872
        %1005 = vmatprep.subr.bf16.mxu0 0
        %1006 = vmatpush1.bf16.msra.mxu0 %v873
        %1007 = vmatprep.subr.bf16.mxu0 0
        %1008 = vmatpush1.bf16.msra.mxu0 %v874
        %1009 = vmatprep.subr.bf16.mxu0 0
        %1010 = vmatpush1.bf16.msra.mxu0 %v875
        %1011 = vmatprep.subr.bf16.mxu0 0
        %1012 = vmatpush1.bf16.msra.mxu0 %v876
        %1013 = vmatprep.mubr.bf16.mxu0 %v512
        %1014 = vmatmul.mubr.bf16.gmra.mrb[0].mxu0 %v511
        %v1015 = vpop.f32.mrb[0].mxu0
        %v1016 = vadd.f32 %v663, %v1015
        %v1017 = vpop.f32.mrb[0].mxu0
        %v1018 = vpop.f32.mrb[0].mxu0
        %v1019 = vadd.f32 %v663, %v1018
        %v1020 = vpop.f32.mrb[0].mxu0
        %1021 = vmatprep.mubr.bf16.mxu0 %v519
        %1022 = vmatmul.mubr.bf16.gmra.mrb[0].mxu0 %v518
        %v1023 = vpop.f32.mrb[0].mxu0
        %v1024 = vadd.f32 %v663, %v1023
        %v1025 = vpop.f32.mrb[0].mxu0
        %v1026 = vpop.f32.mrb[0].mxu0
        %v1027 = vadd.f32 %v663, %v1026
        %v1028 = vpop.f32.mrb[0].mxu0
        %1029 = vmatprep.mubr.bf16.mxu0 %v526
        %1030 = vmatmul.mubr.bf16.gmra.mrb[0].mxu0 %v525
        %v1031 = vpop.f32.mrb[0].mxu0
        %v1032 = vadd.f32 %v663, %v1031
        %v1033 = vpop.f32.mrb[0].mxu0
        %v1034 = vpop.f32.mrb[0].mxu0
        %v1035 = vadd.f32 %v663, %v1034
        %v1036 = vpop.f32.mrb[0].mxu0
        %1037 = vmatprep.mubr.bf16.mxu0 %v533
        %1038 = vmatmul.mubr.bf16.gmra.mrb[0].mxu0 %v532
        %v1039 = vpop.f32.mrb[0].mxu0
        %v1040 = vadd.f32 %v663, %v1039
        %v1041 = vpop.f32.mrb[0].mxu0
        %v1042 = vpop.f32.mrb[0].mxu0
        %v1043 = vadd.f32 %v663, %v1042
        %v1044 = vpop.f32.mrb[0].mxu0
        %1045 = vmatprep.mubr.bf16.mxu0 %v540
        %1046 = vmatmul.mubr.bf16.gmra.mrb[0].mxu0 %v539
        %v1047 = vpop.f32.mrb[0].mxu0
        %v1048 = vadd.f32 %v663, %v1047
        %v1049 = vpop.f32.mrb[0].mxu0
        %v1050 = vpop.f32.mrb[0].mxu0
        %v1051 = vadd.f32 %v663, %v1050
        %v1052 = vpop.f32.mrb[0].mxu0
        %1053 = vmatprep.mubr.bf16.mxu0 %v547
        %1054 = vmatmul.mubr.bf16.gmra.mrb[0].mxu0 %v546
        %v1055 = vpop.f32.mrb[0].mxu0
        %v1056 = vadd.f32 %v663, %v1055
        %v1057 = vpop.f32.mrb[0].mxu0
        %v1058 = vpop.f32.mrb[0].mxu0
        %v1059 = vadd.f32 %v663, %v1058
        %v1060 = vpop.f32.mrb[0].mxu0
        %1061 = vmatprep.mubr.bf16.mxu0 %v554
        %1062 = vmatmul.mubr.bf16.gmra.mrb[0].mxu0 %v553
        %v1063 = vpop.f32.mrb[0].mxu0
        %v1064 = vadd.f32 %v663, %v1063
        %v1065 = vpop.f32.mrb[0].mxu0
        %v1066 = vpop.f32.mrb[0].mxu0
        %v1067 = vadd.f32 %v663, %v1066
        %v1068 = vpop.f32.mrb[0].mxu0
        %1069 = vdwg.mxu0
        %1070 = vmatprep.subr.bf16.mxu0 0
        %1071 = vmatpush1.bf16.msra.mxu0 %v877
        %1072 = vmatprep.subr.bf16.mxu0 0
        %1073 = vmatpush1.bf16.msra.mxu0 %v878
        %1074 = vmatprep.subr.bf16.mxu0 0
        %1075 = vmatpush1.bf16.msra.mxu0 %v879
        %1076 = vmatprep.subr.bf16.mxu0 0
        %1077 = vmatpush1.bf16.msra.mxu0 %v880
        %1078 = vmatprep.subr.bf16.mxu0 0
        %1079 = vmatpush1.bf16.msra.mxu0 %v881
        %1080 = vmatprep.subr.bf16.mxu0 0
        %1081 = vmatpush1.bf16.msra.mxu0 %v882
        %1082 = vmatprep.subr.bf16.mxu0 0
        %1083 = vmatpush1.bf16.msra.mxu0 %v883
        %1084 = vmatprep.subr.bf16.mxu0 0
        %1085 = vmatpush1.bf16.msra.mxu0 %v884
        %1086 = vmatprep.subr.bf16.mxu0 0
        %1087 = vmatpush1.bf16.msra.mxu0 %v885
        %1088 = vmatprep.subr.bf16.mxu0 0
        %1089 = vmatpush1.bf16.msra.mxu0 %v886
        %1090 = vmatprep.subr.bf16.mxu0 0
        %1091 = vmatpush1.bf16.msra.mxu0 %v887
        %1092 = vmatprep.subr.bf16.mxu0 0
        %1093 = vmatpush1.bf16.msra.mxu0 %v888
        %1094 = vmatprep.subr.bf16.mxu0 0
        %1095 = vmatpush1.bf16.msra.mxu0 %v889
        %1096 = vmatprep.subr.bf16.mxu0 0
        %1097 = vmatpush1.bf16.msra.mxu0 %v890
        %1098 = vmatprep.subr.bf16.mxu0 0
        %1099 = vmatpush1.bf16.msra.mxu0 %v891
        %1100 = vmatprep.subr.bf16.mxu0 0
        %1101 = vmatpush1.bf16.msra.mxu0 %v892
        %1102 = vmatprep.mubr.bf16.mxu0 %v514
        %1103 = vmatmul.mubr.bf16.gmra.mrb[0].mxu0 %v513
        %v1104 = vpop.f32.mrb[0].mxu0
        %v1105 = vadd.f32 %v1016, %v1104
        %v1106 = vpop.f32.mrb[0].mxu0
        %v1107 = vpop.f32.mrb[0].mxu0
        %v1108 = vadd.f32 %v1019, %v1107
        %v1109 = vpop.f32.mrb[0].mxu0
        %1110 = vmatprep.mubr.bf16.mxu0 %v521
        %1111 = vmatmul.mubr.bf16.gmra.mrb[0].mxu0 %v520
        %v1112 = vpop.f32.mrb[0].mxu0
        %v1113 = vadd.f32 %v1024, %v1112
        %v1114 = vpop.f32.mrb[0].mxu0
        %v1115 = vpop.f32.mrb[0].mxu0
        %v1116 = vadd.f32 %v1027, %v1115
        %v1117 = vpop.f32.mrb[0].mxu0
        %1118 = vmatprep.mubr.bf16.mxu0 %v528
        %1119 = vmatmul.mubr.bf16.gmra.mrb[0].mxu0 %v527
        %v1120 = vpop.f32.mrb[0].mxu0
        %v1121 = vadd.f32 %v1032, %v1120
        %v1122 = vpop.f32.mrb[0].mxu0
        %v1123 = vpop.f32.mrb[0].mxu0
        %v1124 = vadd.f32 %v1035, %v1123
        %v1125 = vpop.f32.mrb[0].mxu0
        %1126 = vmatprep.mubr.bf16.mxu0 %v535
        %1127 = vmatmul.mubr.bf16.gmra.mrb[0].mxu0 %v534
        %v1128 = vpop.f32.mrb[0].mxu0
        %v1129 = vadd.f32 %v1040, %v1128
        %v1130 = vpop.f32.mrb[0].mxu0
        %v1131 = vpop.f32.mrb[0].mxu0
        %v1132 = vadd.f32 %v1043, %v1131
        %v1133 = vpop.f32.mrb[0].mxu0
        %1134 = vmatprep.mubr.bf16.mxu0 %v542
        %1135 = vmatmul.mubr.bf16.gmra.mrb[0].mxu0 %v541
        %v1136 = vpop.f32.mrb[0].mxu0
        %v1137 = vadd.f32 %v1048, %v1136
        %v1138 = vpop.f32.mrb[0].mxu0
        %v1139 = vpop.f32.mrb[0].mxu0
        %v1140 = vadd.f32 %v1051, %v1139
        %v1141 = vpop.f32.mrb[0].mxu0
        %1142 = vmatprep.mubr.bf16.mxu0 %v549
        %1143 = vmatmul.mubr.bf16.gmra.mrb[0].mxu0 %v548
        %v1144 = vpop.f32.mrb[0].mxu0
        %v1145 = vadd.f32 %v1056, %v1144
        %v1146 = vpop.f32.mrb[0].mxu0
        %v1147 = vpop.f32.mrb[0].mxu0
        %v1148 = vadd.f32 %v1059, %v1147
        %v1149 = vpop.f32.mrb[0].mxu0
        %1150 = vmatprep.mubr.bf16.mxu0 %v556
        %1151 = vmatmul.mubr.bf16.gmra.mrb[0].mxu0 %v555
        %v1152 = vpop.f32.mrb[0].mxu0
        %v1153 = vadd.f32 %v1064, %v1152
        %v1154 = vpop.f32.mrb[0].mxu0
        %v1155 = vpop.f32.mrb[0].mxu0
        %v1156 = vadd.f32 %v1067, %v1155
        %v1157 = vpop.f32.mrb[0].mxu0
        %1158 = vdwg.mxu0
        %1159 = vmatprep.subr.bf16.mxu0 0
        %1160 = vmatpush1.bf16.msra.mxu0 %v893
        %1161 = vmatprep.subr.bf16.mxu0 0
        %1162 = vmatpush1.bf16.msra.mxu0 %v894
        %1163 = vmatprep.subr.bf16.mxu0 0
        %1164 = vmatpush1.bf16.msra.mxu0 %v895
        %1165 = vmatprep.subr.bf16.mxu0 0
        %1166 = vmatpush1.bf16.msra.mxu0 %v896
        %1167 = vmatprep.subr.bf16.mxu0 0
        %1168 = vmatpush1.bf16.msra.mxu0 %v897
        %1169 = vmatprep.subr.bf16.mxu0 0
        %1170 = vmatpush1.bf16.msra.mxu0 %v898
        %1171 = vmatprep.subr.bf16.mxu0 0
        %1172 = vmatpush1.bf16.msra.mxu0 %v899
        %1173 = vmatprep.subr.bf16.mxu0 0
        %1174 = vmatpush1.bf16.msra.mxu0 %v900
        %1175 = vmatprep.subr.bf16.mxu0 0
        %1176 = vmatpush1.bf16.msra.mxu0 %v901
        %1177 = vmatprep.subr.bf16.mxu0 0
        %1178 = vmatpush1.bf16.msra.mxu0 %v902
        %1179 = vmatprep.subr.bf16.mxu0 0
        %1180 = vmatpush1.bf16.msra.mxu0 %v903
        %1181 = vmatprep.subr.bf16.mxu0 0
        %1182 = vmatpush1.bf16.msra.mxu0 %v904
        %1183 = vmatprep.subr.bf16.mxu0 0
        %1184 = vmatpush1.bf16.msra.mxu0 %v905
        %1185 = vmatprep.subr.bf16.mxu0 0
        %1186 = vmatpush1.bf16.msra.mxu0 %v906
        %1187 = vmatprep.subr.bf16.mxu0 0
        %1188 = vmatpush1.bf16.msra.mxu0 %v907
        %1189 = vmatprep.subr.bf16.mxu0 0
        %1190 = vmatpush1.bf16.msra.mxu0 %v908
        %1191 = vmatprep.mubr.bf16.mxu0 %v516
        %1192 = vmatmul.mubr.bf16.gmra.mrb[0].mxu0 %v515
        %v1193 = vpop.f32.mrb[0].mxu0
        %v1194 = vadd.f32 %v1105, %v1193
        %v1195 = vpop.f32.mrb[0].mxu0
        %v1196 = vpop.f32.mrb[0].mxu0
        %v1197 = vadd.f32 %v1108, %v1196
        %v1198 = vpop.f32.mrb[0].mxu0
        %1199 = vmatprep.mubr.bf16.mxu0 %v523
        %1200 = vmatmul.mubr.bf16.gmra.mrb[0].mxu0 %v522
        %v1201 = vpop.f32.mrb[0].mxu0
        %v1202 = vadd.f32 %v1113, %v1201
        %v1203 = vpop.f32.mrb[0].mxu0
        %v1204 = vpop.f32.mrb[0].mxu0
        %v1205 = vadd.f32 %v1116, %v1204
        %v1206 = vpop.f32.mrb[0].mxu0
        %1207 = vmatprep.mubr.bf16.mxu0 %v530
        %1208 = vmatmul.mubr.bf16.gmra.mrb[0].mxu0 %v529
        %v1209 = vpop.f32.mrb[0].mxu0
        %v1210 = vadd.f32 %v1121, %v1209
        %v1211 = vpop.f32.mrb[0].mxu0
        %v1212 = vpop.f32.mrb[0].mxu0
        %v1213 = vadd.f32 %v1124, %v1212
        %v1214 = vpop.f32.mrb[0].mxu0
        %1215 = vmatprep.mubr.bf16.mxu0 %v537
        %1216 = vmatmul.mubr.bf16.gmra.mrb[0].mxu0 %v536
        %v1217 = vpop.f32.mrb[0].mxu0
        %v1218 = vadd.f32 %v1129, %v1217
        %v1219 = vpop.f32.mrb[0].mxu0
        %v1220 = vpop.f32.mrb[0].mxu0
        %v1221 = vadd.f32 %v1132, %v1220
        %v1222 = vpop.f32.mrb[0].mxu0
        %1223 = vmatprep.mubr.bf16.mxu0 %v544
        %1224 = vmatmul.mubr.bf16.gmra.mrb[0].mxu0 %v543
        %v1225 = vpop.f32.mrb[0].mxu0
        %v1226 = vadd.f32 %v1137, %v1225
        %v1227 = vpop.f32.mrb[0].mxu0
        %v1228 = vpop.f32.mrb[0].mxu0
        %v1229 = vadd.f32 %v1140, %v1228
        %v1230 = vpop.f32.mrb[0].mxu0
        %1231 = vmatprep.mubr.bf16.mxu0 %v551
        %1232 = vmatmul.mubr.bf16.gmra.mrb[0].mxu0 %v550
        %v1233 = vpop.f32.mrb[0].mxu0
        %v1234 = vadd.f32 %v1145, %v1233
        %v1235 = vpop.f32.mrb[0].mxu0
        %v1236 = vpop.f32.mrb[0].mxu0
        %v1237 = vadd.f32 %v1148, %v1236
        %v1238 = vpop.f32.mrb[0].mxu0
        %1239 = vmatprep.mubr.bf16.mxu0 %v558
        %1240 = vmatmul.mubr.bf16.gmra.mrb[0].mxu0 %v557
        %v1241 = vpop.f32.mrb[0].mxu0
        %v1242 = vadd.f32 %v1153, %v1241
        %v1243 = vpop.f32.mrb[0].mxu0
        %v1244 = vpop.f32.mrb[0].mxu0
        %v1245 = vadd.f32 %v1156, %v1244
        %v1246 = vpop.f32.mrb[0].mxu0
        %1247 = vdwg.mxu0
        %1248 = vmatprep.subr.bf16.mxu0 0
        %1249 = vmatpush1.bf16.msra.mxu0 %v909
        %1250 = vmatprep.subr.bf16.mxu0 0
        %1251 = vmatpush1.bf16.msra.mxu0 0
        %1252 = vmatprep.subr.bf16.mxu0 0
        %1253 = vmatpush1.bf16.msra.mxu0 0
        %1254 = vmatprep.subr.bf16.mxu0 0
        %1255 = vmatpush1.bf16.msra.mxu0 0
        %1256 = vmatprep.subr.bf16.mxu0 0
        %1257 = vmatpush1.bf16.msra.mxu0 0
        %1258 = vmatprep.subr.bf16.mxu0 0
        %1259 = vmatpush1.bf16.msra.mxu0 0
        %1260 = vmatprep.subr.bf16.mxu0 0
        %1261 = vmatpush1.bf16.msra.mxu0 0
        %1262 = vmatprep.subr.bf16.mxu0 0
        %1263 = vmatpush1.bf16.msra.mxu0 0
        %1264 = vmatprep.subr.bf16.mxu0 0
        %1265 = vmatpush1.bf16.msra.mxu0 0
        %1266 = vmatprep.subr.bf16.mxu0 0
        %1267 = vmatpush1.bf16.msra.mxu0 0
        %1268 = vmatprep.subr.bf16.mxu0 0
        %1269 = vmatpush1.bf16.msra.mxu0 0
        %1270 = vmatprep.subr.bf16.mxu0 0
        %1271 = vmatpush1.bf16.msra.mxu0 0
        %1272 = vmatprep.subr.bf16.mxu0 0
        %1273 = vmatpush1.bf16.msra.mxu0 0
        %1274 = vmatprep.subr.bf16.mxu0 0
        %1275 = vmatpush1.bf16.msra.mxu0 0
        %1276 = vmatprep.subr.bf16.mxu0 0
        %1277 = vmatpush1.bf16.msra.mxu0 0
        %1278 = vmatprep.subr.bf16.mxu0 0
        %1279 = vmatpush1.bf16.msra.mxu0 0
        %1280 = vmatprep.mubr.bf16.mxu0 0
        %1281 = vmatmul.mubr.bf16.gmra.mrb[0].mxu0 %v961
        %v1282 = vpop.f32.mrb[0].mxu0
        %v1283 = vadd.f32 %v1194, %v1282
        %v1284 = vpop.f32.mrb[0].mxu0
        %v1285 = vpop.f32.mrb[0].mxu0
        %v1286 = vadd.f32 %v1197, %v1285
        %v1287 = vpop.f32.mrb[0].mxu0
        %1288 = vmatprep.mubr.bf16.mxu0 0
        %1289 = vmatmul.mubr.bf16.gmra.mrb[0].mxu0 %v964
        %v1290 = vpop.f32.mrb[0].mxu0
        %v1291 = vadd.f32 %v1202, %v1290
        %v1292 = vpop.f32.mrb[0].mxu0
        %v1293 = vpop.f32.mrb[0].mxu0
        %v1294 = vadd.f32 %v1205, %v1293
        %v1295 = vpop.f32.mrb[0].mxu0
        %1296 = vmatprep.mubr.bf16.mxu0 0
        %1297 = vmatmul.mubr.bf16.gmra.mrb[0].mxu0 %v967
        %v1298 = vpop.f32.mrb[0].mxu0
        %v1299 = vadd.f32 %v1210, %v1298
        %v1300 = vpop.f32.mrb[0].mxu0
        %v1301 = vpop.f32.mrb[0].mxu0
        %v1302 = vadd.f32 %v1213, %v1301
        %v1303 = vpop.f32.mrb[0].mxu0
        %1304 = vmatprep.mubr.bf16.mxu0 0
        %1305 = vmatmul.mubr.bf16.gmra.mrb[0].mxu0 %v970
        %v1306 = vpop.f32.mrb[0].mxu0
        %v1307 = vadd.f32 %v1218, %v1306
        %v1308 = vpop.f32.mrb[0].mxu0
        %v1309 = vpop.f32.mrb[0].mxu0
        %v1310 = vadd.f32 %v1221, %v1309
        %v1311 = vpop.f32.mrb[0].mxu0
        %1312 = vmatprep.mubr.bf16.mxu0 0
        %1313 = vmatmul.mubr.bf16.gmra.mrb[0].mxu0 %v973
        %v1314 = vpop.f32.mrb[0].mxu0
        %v1315 = vadd.f32 %v1226, %v1314
        %v1316 = vpop.f32.mrb[0].mxu0
        %v1317 = vpop.f32.mrb[0].mxu0
        %v1318 = vadd.f32 %v1229, %v1317
        %v1319 = vpop.f32.mrb[0].mxu0
        %1320 = vmatprep.mubr.bf16.mxu0 0
        %1321 = vmatmul.mubr.bf16.gmra.mrb[0].mxu0 %v976
        %v1322 = vpop.f32.mrb[0].mxu0
        %v1323 = vadd.f32 %v1234, %v1322
        %v1324 = vpop.f32.mrb[0].mxu0
        %v1325 = vpop.f32.mrb[0].mxu0
        %v1326 = vadd.f32 %v1237, %v1325
        %v1327 = vpop.f32.mrb[0].mxu0
        %1328 = vmatprep.mubr.bf16.mxu0 0
        %1329 = vmatmul.mubr.bf16.gmra.mrb[0].mxu0 %v979
        %v1330 = vpop.f32.mrb[0].mxu0
        %v1331 = vadd.f32 %v1242, %v1330
        %v1332 = vpop.f32.mrb[0].mxu0
        %v1333 = vpop.f32.mrb[0].mxu0
        %v1334 = vadd.f32 %v1245, %v1333
        %v1335 = vpop.f32.mrb[0].mxu0
        %1336 = vdwg.mxu0
        %v1337 = vmax.f32 %v1283, 0.0
        %v1338 = vmax.f32 %v1286, 0.0
        %v1339 = vmax.f32 %v1291, 0.0
        %v1340 = vmax.f32 %v1294, 0.0
        %v1341 = vmax.f32 %v1299, 0.0
        %v1342 = vmax.f32 %v1302, 0.0
        %v1343 = vmax.f32 %v1307, 0.0
        %v1344 = vmax.f32 %v1310, 0.0
        %v1345 = vmax.f32 %v1315, 0.0
        %v1346 = vmax.f32 %v1318, 0.0
        %v1347 = vmax.f32 %v1323, 0.0
        %v1348 = vmax.f32 %v1326, 0.0
        %v1349 = vmax.f32 %v1331, 0.0
        %v1350 = vmax.f32 %v1334, 0.0
        %v1351 = vpack.c.bf16 %v1338, %v1337
        %v1352 = vpack.c.bf16 %v1340, %v1339
        %v1353 = vpack.c.bf16 %v1342, %v1341
        %v1354 = vpack.c.bf16 %v1344, %v1343
        %v1355 = vpack.c.bf16 %v1346, %v1345
        %v1356 = vpack.c.bf16 %v1348, %v1347
        %v1357 = vpack.c.bf16 %v1350, %v1349
        %v1358 = vld [vmem:[#allocation7] sm:$0xf]
        %v1359 = vld [vmem:[#allocation7 + $0x4] sm:$0xf]
        %v1360 = vld [vmem:[#allocation7 + $0x8] sm:$0xf]
        %v1361 = vld [vmem:[#allocation7 + $0xc] sm:$0xf]
        %v1362 = vld [vmem:[#allocation7 + $0x10] sm:$0xf]
        %v1363 = vld [vmem:[#allocation7 + $0x14] sm:$0xf]
        %v1364 = vld [vmem:[#allocation7 + $0x18] sm:$0xf]
        %v1365 = vld [vmem:[#allocation7 + $0x1c] sm:$0xf]
        %v1366 = vld [vmem:[#allocation7 + $0x20] sm:$0xf]
        %v1367 = vld [vmem:[#allocation7 + $0x24] sm:$0xf]
        %v1368 = vld [vmem:[#allocation7 + $0x28] sm:$0xf]
        %v1369 = vld [vmem:[#allocation7 + $0x2c] sm:$0xf]
        %v1370 = vld [vmem:[#allocation7 + $0x30] sm:$0xf]
        %v1371 = vld [vmem:[#allocation7 + $0x34] sm:$0xf]
        %v1372 = vld [vmem:[#allocation7 + $0x38] sm:$0xf]
        %v1373 = vld [vmem:[#allocation7 + $0x3c] sm:$0xf]
        %v1374 = vld [vmem:[%s4] sm:$0x1]
        %v1376 = vlaneseq
        %v1377 = vshrl.u32 %v1376, 7
        %v1378 = vsub.s32 0, %v1377
        %v1379 = vrot.slane %v1374, %v1378
        %v1397 = vunpack.c.l.b16 %v1358
        %v1398 = vunpack.c.l.b16 %v1359
        %v1399 = vunpack.c.l.b16 %v1360
        %v1400 = vunpack.c.l.b16 %v1361
        %v1401 = vunpack.c.l.b16 %v1362
        %v1402 = vunpack.c.l.b16 %v1363
        %v1403 = vunpack.c.l.b16 %v1364
        %v1404 = vunpack.c.l.b16 %v1365
        %v1405 = vunpack.c.l.b16 %v1366
        %v1406 = vunpack.c.l.b16 %v1367
        %v1407 = vunpack.c.l.b16 %v1368
        %v1408 = vunpack.c.l.b16 %v1369
        %v1409 = vunpack.c.l.b16 %v1370
        %v1410 = vunpack.c.l.b16 %v1371
        %v1411 = vunpack.c.l.b16 %v1372
        %v1412 = vunpack.c.l.b16 %v1373
        %v1413 = vpack.c.b16 %v1398, %v1397
        %v1414 = vpack.c.b16 %v1400, %v1399
        %v1415 = vpack.c.b16 %v1402, %v1401
        %v1416 = vpack.c.b16 %v1404, %v1403
        %v1417 = vpack.c.b16 %v1406, %v1405
        %v1418 = vpack.c.b16 %v1408, %v1407
        %v1419 = vpack.c.b16 %v1410, %v1409
        %v1420 = vpack.c.b16 %v1412, %v1411
        %1429 = vmatprep.subr.bf16.mxu0 0
        %1430 = vmatpush1.bf16.msra.mxu0 %v1413
        %1431 = vmatprep.subr.bf16.mxu0 0
        %1432 = vmatpush1.bf16.msra.mxu0 %v1414
        %1433 = vmatprep.subr.bf16.mxu0 0
        %1434 = vmatpush1.bf16.msra.mxu0 %v1415
        %1435 = vmatprep.subr.bf16.mxu0 0
        %1436 = vmatpush1.bf16.msra.mxu0 %v1416
        %1437 = vmatprep.subr.bf16.mxu0 0
        %1438 = vmatpush1.bf16.msra.mxu0 %v1417
        %1439 = vmatprep.subr.bf16.mxu0 0
        %1440 = vmatpush1.bf16.msra.mxu0 %v1418
        %1441 = vmatprep.subr.bf16.mxu0 0
        %1442 = vmatpush1.bf16.msra.mxu0 %v1419
        %1443 = vmatprep.subr.bf16.mxu0 0
        %1444 = vmatpush1.bf16.msra.mxu0 %v1420
        %1445 = vmatprep.subr.bf16.mxu0 0
        %1446 = vmatpush1.bf16.msra.mxu0 0
        %1447 = vmatprep.subr.bf16.mxu0 0
        %1448 = vmatpush1.bf16.msra.mxu0 0
        %1449 = vmatprep.subr.bf16.mxu0 0
        %1450 = vmatpush1.bf16.msra.mxu0 0
        %1451 = vmatprep.subr.bf16.mxu0 0
        %1452 = vmatpush1.bf16.msra.mxu0 0
        %1453 = vmatprep.subr.bf16.mxu0 0
        %1454 = vmatpush1.bf16.msra.mxu0 0
        %1455 = vmatprep.subr.bf16.mxu0 0
        %1456 = vmatpush1.bf16.msra.mxu0 0
        %1457 = vmatprep.subr.bf16.mxu0 0
        %1458 = vmatpush1.bf16.msra.mxu0 0
        %1459 = vmatprep.subr.bf16.mxu0 0
        %1460 = vmatpush1.bf16.msra.mxu0 0
        %1461 = vmatprep.mubr.bf16.mxu0 0
        %1462 = vmatmul.mubr.bf16.gmra.mrb[0].mxu0 %v1351
        %v1463 = vpop.f32.mrb[0].mxu0
        %v1464 = vadd.f32 %v1379, %v1463
        %v1465 = vpop.f32.mrb[0].mxu0
        %v1466 = vpop.f32.mrb[0].mxu0
        %v1467 = vadd.f32 %v1379, %v1466
        %v1468 = vpop.f32.mrb[0].mxu0
        %1469 = vmatprep.mubr.bf16.mxu0 0
        %1470 = vmatmul.mubr.bf16.gmra.mrb[0].mxu0 %v1352
        %v1471 = vpop.f32.mrb[0].mxu0
        %v1472 = vadd.f32 %v1379, %v1471
        %v1473 = vpop.f32.mrb[0].mxu0
        %v1474 = vpop.f32.mrb[0].mxu0
        %v1475 = vadd.f32 %v1379, %v1474
        %v1476 = vpop.f32.mrb[0].mxu0
        %1477 = vmatprep.mubr.bf16.mxu0 0
        %1478 = vmatmul.mubr.bf16.gmra.mrb[0].mxu0 %v1353
        %v1479 = vpop.f32.mrb[0].mxu0
        %v1480 = vadd.f32 %v1379, %v1479
        %v1481 = vpop.f32.mrb[0].mxu0
        %v1482 = vpop.f32.mrb[0].mxu0
        %v1483 = vadd.f32 %v1379, %v1482
        %v1484 = vpop.f32.mrb[0].mxu0
        %1485 = vmatprep.mubr.bf16.mxu0 0
        %1486 = vmatmul.mubr.bf16.gmra.mrb[0].mxu0 %v1354
        %v1487 = vpop.f32.mrb[0].mxu0
        %v1488 = vadd.f32 %v1379, %v1487
        %v1489 = vpop.f32.mrb[0].mxu0
        %v1490 = vpop.f32.mrb[0].mxu0
        %v1491 = vadd.f32 %v1379, %v1490
        %v1492 = vpop.f32.mrb[0].mxu0
        %1493 = vmatprep.mubr.bf16.mxu0 0
        %1494 = vmatmul.mubr.bf16.gmra.mrb[0].mxu0 %v1355
        %v1495 = vpop.f32.mrb[0].mxu0
        %v1496 = vadd.f32 %v1379, %v1495
        %v1497 = vpop.f32.mrb[0].mxu0
        %v1498 = vpop.f32.mrb[0].mxu0
        %v1499 = vadd.f32 %v1379, %v1498
        %v1500 = vpop.f32.mrb[0].mxu0
        %1501 = vmatprep.mubr.bf16.mxu0 0
        %1502 = vmatmul.mubr.bf16.gmra.mrb[0].mxu0 %v1356
        %v1503 = vpop.f32.mrb[0].mxu0
        %v1504 = vadd.f32 %v1379, %v1503
        %v1505 = vpop.f32.mrb[0].mxu0
        %v1506 = vpop.f32.mrb[0].mxu0
        %v1507 = vadd.f32 %v1379, %v1506
        %v1508 = vpop.f32.mrb[0].mxu0
        %1509 = vmatprep.mubr.bf16.mxu0 0
        %1510 = vmatmul.mubr.bf16.gmra.mrb[0].mxu0 %v1357
        %v1511 = vpop.f32.mrb[0].mxu0
        %v1512 = vadd.f32 %v1379, %v1511
        %v1513 = vpop.f32.mrb[0].mxu0
        %v1514 = vpop.f32.mrb[0].mxu0
        %v1515 = vadd.f32 %v1379, %v1514
        %v1516 = vpop.f32.mrb[0].mxu0
        %1517 = vdwg.mxu0
        %v1518 = vmax.f32 %v1464, 0.0
        %v1519 = vmax.f32 %v1467, 0.0
        %v1520 = vmax.f32 %v1472, 0.0
        %v1521 = vmax.f32 %v1475, 0.0
        %v1522 = vmax.f32 %v1480, 0.0
        %v1523 = vmax.f32 %v1483, 0.0
        %v1524 = vmax.f32 %v1488, 0.0
        %v1525 = vmax.f32 %v1491, 0.0
        %v1526 = vmax.f32 %v1496, 0.0
        %v1527 = vmax.f32 %v1499, 0.0
        %v1528 = vmax.f32 %v1504, 0.0
        %v1529 = vmax.f32 %v1507, 0.0
        %v1530 = vmax.f32 %v1512, 0.0
        %v1531 = vmax.f32 %v1515, 0.0
        %v1532 = vpack.c.bf16 %v1519, %v1518
        %v1533 = vpack.c.bf16 %v1521, %v1520
        %v1534 = vpack.c.bf16 %v1523, %v1522
        %v1535 = vpack.c.bf16 %v1525, %v1524
        %v1536 = vpack.c.bf16 %v1527, %v1526
        %v1537 = vpack.c.bf16 %v1529, %v1528
        %v1538 = vpack.c.bf16 %v1531, %v1530
        %v1539 = vld [vmem:[#allocation8] sm:$0xf]
        %v1540 = vld [vmem:[#allocation8 + $0x4] sm:$0xf]
        %v1541 = vld [vmem:[#allocation8 + $0x8] sm:$0xf]
        %v1542 = vld [vmem:[#allocation8 + $0xc] sm:$0xf]
        %v1543 = vld [vmem:[#allocation8 + $0x10] sm:$0xf]
        %v1544 = vld [vmem:[#allocation8 + $0x14] sm:$0xf]
        %v1545 = vld [vmem:[#allocation8 + $0x18] sm:$0xf]
        %v1546 = vld [vmem:[#allocation8 + $0x1c] sm:$0xf]
        %v1547 = vld [vmem:[#allocation8 + $0x20] sm:$0xf]
        %v1548 = vld [vmem:[#allocation8 + $0x24] sm:$0xf]
        %v1549 = vld [vmem:[#allocation8 + $0x28] sm:$0xf]
        %v1550 = vld [vmem:[#allocation8 + $0x2c] sm:$0xf]
        %v1551 = vld [vmem:[#allocation8 + $0x30] sm:$0xf]
        %v1552 = vld [vmem:[#allocation8 + $0x34] sm:$0xf]
        %v1553 = vld [vmem:[#allocation8 + $0x38] sm:$0xf]
        %v1554 = vld [vmem:[#allocation8 + $0x3c] sm:$0xf]
        %v1555 = vld [vmem:[%s6] sm:$0x1]
        %v1557 = vlaneseq
        %v1558 = vshrl.u32 %v1557, 7
        %v1559 = vsub.s32 0, %v1558
        %v1560 = vrot.slane %v1555, %v1559
        %v1578 = vunpack.c.l.b16 %v1539
        %v1579 = vunpack.c.l.b16 %v1540
        %v1580 = vunpack.c.l.b16 %v1541
        %v1581 = vunpack.c.l.b16 %v1542
        %v1582 = vunpack.c.l.b16 %v1543
        %v1583 = vunpack.c.l.b16 %v1544
        %v1584 = vunpack.c.l.b16 %v1545
        %v1585 = vunpack.c.l.b16 %v1546
        %v1586 = vunpack.c.l.b16 %v1547
        %v1587 = vunpack.c.l.b16 %v1548
        %v1588 = vunpack.c.l.b16 %v1549
        %v1589 = vunpack.c.l.b16 %v1550
        %v1590 = vunpack.c.l.b16 %v1551
        %v1591 = vunpack.c.l.b16 %v1552
        %v1592 = vunpack.c.l.b16 %v1553
        %v1593 = vunpack.c.l.b16 %v1554
        %v1594 = vpack.c.b16 %v1579, %v1578
        %v1595 = vpack.c.b16 %v1581, %v1580
        %v1596 = vpack.c.b16 %v1583, %v1582
        %v1597 = vpack.c.b16 %v1585, %v1584
        %v1598 = vpack.c.b16 %v1587, %v1586
        %v1599 = vpack.c.b16 %v1589, %v1588
        %v1600 = vpack.c.b16 %v1591, %v1590
        %v1601 = vpack.c.b16 %v1593, %v1592
        %1610 = vmatprep.subr.bf16.mxu0 0
        %1611 = vmatpush1.bf16.msra.mxu0 %v1594
        %1612 = vmatprep.subr.bf16.mxu0 0
        %1613 = vmatpush1.bf16.msra.mxu0 %v1595
        %1614 = vmatprep.subr.bf16.mxu0 0
        %1615 = vmatpush1.bf16.msra.mxu0 %v1596
        %1616 = vmatprep.subr.bf16.mxu0 0
        %1617 = vmatpush1.bf16.msra.mxu0 %v1597
        %1618 = vmatprep.subr.bf16.mxu0 0
        %1619 = vmatpush1.bf16.msra.mxu0 %v1598
        %1620 = vmatprep.subr.bf16.mxu0 0
        %1621 = vmatpush1.bf16.msra.mxu0 %v1599
        %1622 = vmatprep.subr.bf16.mxu0 0
        %1623 = vmatpush1.bf16.msra.mxu0 %v1600
        %1624 = vmatprep.subr.bf16.mxu0 0
        %1625 = vmatpush1.bf16.msra.mxu0 %v1601
        %1626 = vmatprep.subr.bf16.mxu0 0
        %1627 = vmatpush1.bf16.msra.mxu0 0
        %1628 = vmatprep.subr.bf16.mxu0 0
        %1629 = vmatpush1.bf16.msra.mxu0 0
        %1630 = vmatprep.subr.bf16.mxu0 0
        %1631 = vmatpush1.bf16.msra.mxu0 0
        %1632 = vmatprep.subr.bf16.mxu0 0
        %1633 = vmatpush1.bf16.msra.mxu0 0
        %1634 = vmatprep.subr.bf16.mxu0 0
        %1635 = vmatpush1.bf16.msra.mxu0 0
        %1636 = vmatprep.subr.bf16.mxu0 0
        %1637 = vmatpush1.bf16.msra.mxu0 0
        %1638 = vmatprep.subr.bf16.mxu0 0
        %1639 = vmatpush1.bf16.msra.mxu0 0
        %1640 = vmatprep.subr.bf16.mxu0 0
        %1641 = vmatpush1.bf16.msra.mxu0 0
        %1642 = vmatprep.mubr.bf16.mxu0 0
        %1643 = vmatmul.mubr.bf16.gmra.mrb[0].mxu0 %v1532
        %v1644 = vpop.f32.mrb[0].mxu0
        %v1645 = vadd.f32 %v1560, %v1644
        %v1646 = vpop.f32.mrb[0].mxu0
        %v1647 = vpop.f32.mrb[0].mxu0
        %v1648 = vadd.f32 %v1560, %v1647
        %v1649 = vpop.f32.mrb[0].mxu0
        %1650 = vmatprep.mubr.bf16.mxu0 0
        %1651 = vmatmul.mubr.bf16.gmra.mrb[0].mxu0 %v1533
        %v1652 = vpop.f32.mrb[0].mxu0
        %v1653 = vadd.f32 %v1560, %v1652
        %v1654 = vpop.f32.mrb[0].mxu0
        %v1655 = vpop.f32.mrb[0].mxu0
        %v1656 = vadd.f32 %v1560, %v1655
        %v1657 = vpop.f32.mrb[0].mxu0
        %1658 = vmatprep.mubr.bf16.mxu0 0
        %1659 = vmatmul.mubr.bf16.gmra.mrb[0].mxu0 %v1534
        %v1660 = vpop.f32.mrb[0].mxu0
        %v1661 = vadd.f32 %v1560, %v1660
        %v1662 = vpop.f32.mrb[0].mxu0
        %v1663 = vpop.f32.mrb[0].mxu0
        %v1664 = vadd.f32 %v1560, %v1663
        %v1665 = vpop.f32.mrb[0].mxu0
        %1666 = vmatprep.mubr.bf16.mxu0 0
        %1667 = vmatmul.mubr.bf16.gmra.mrb[0].mxu0 %v1535
        %v1668 = vpop.f32.mrb[0].mxu0
        %v1669 = vadd.f32 %v1560, %v1668
        %v1670 = vpop.f32.mrb[0].mxu0
        %v1671 = vpop.f32.mrb[0].mxu0
        %v1672 = vadd.f32 %v1560, %v1671
        %v1673 = vpop.f32.mrb[0].mxu0
        %1674 = vmatprep.mubr.bf16.mxu0 0
        %1675 = vmatmul.mubr.bf16.gmra.mrb[0].mxu0 %v1536
        %v1676 = vpop.f32.mrb[0].mxu0
        %v1677 = vadd.f32 %v1560, %v1676
        %v1678 = vpop.f32.mrb[0].mxu0
        %v1679 = vpop.f32.mrb[0].mxu0
        %v1680 = vadd.f32 %v1560, %v1679
        %v1681 = vpop.f32.mrb[0].mxu0
        %1682 = vmatprep.mubr.bf16.mxu0 0
        %1683 = vmatmul.mubr.bf16.gmra.mrb[0].mxu0 %v1537
        %v1684 = vpop.f32.mrb[0].mxu0
        %v1685 = vadd.f32 %v1560, %v1684
        %v1686 = vpop.f32.mrb[0].mxu0
        %v1687 = vpop.f32.mrb[0].mxu0
        %v1688 = vadd.f32 %v1560, %v1687
        %v1689 = vpop.f32.mrb[0].mxu0
        %1690 = vmatprep.mubr.bf16.mxu0 0
        %1691 = vmatmul.mubr.bf16.gmra.mrb[0].mxu0 %v1538
        %v1692 = vpop.f32.mrb[0].mxu0
        %v1693 = vadd.f32 %v1560, %v1692
        %v1694 = vpop.f32.mrb[0].mxu0
        %v1695 = vpop.f32.mrb[0].mxu0
        %v1696 = vadd.f32 %v1560, %v1695
        %v1697 = vpop.f32.mrb[0].mxu0
        %1698 = vdwg.mxu0
        %v1699 = vmax.f32 %v1645, 0.0
        %v1700 = vmax.f32 %v1648, 0.0
        %v1701 = vmax.f32 %v1653, 0.0
        %v1702 = vmax.f32 %v1656, 0.0
        %v1703 = vmax.f32 %v1661, 0.0
        %v1704 = vmax.f32 %v1664, 0.0
        %v1705 = vmax.f32 %v1669, 0.0
        %v1706 = vmax.f32 %v1672, 0.0
        %v1707 = vmax.f32 %v1677, 0.0
        %v1708 = vmax.f32 %v1680, 0.0
        %v1709 = vmax.f32 %v1685, 0.0
        %v1710 = vmax.f32 %v1688, 0.0
        %v1711 = vmax.f32 %v1693, 0.0
        %v1712 = vmax.f32 %v1696, 0.0
        %v1713 = vpack.c.bf16 %v1700, %v1699
        %v1714 = vpack.c.bf16 %v1702, %v1701
        %v1715 = vpack.c.bf16 %v1704, %v1703
        %v1716 = vpack.c.bf16 %v1706, %v1705
        %v1717 = vpack.c.bf16 %v1708, %v1707
        %v1718 = vpack.c.bf16 %v1710, %v1709
        %v1719 = vpack.c.bf16 %v1712, %v1711
        %v1720 = vld [vmem:[#allocation10] sm:$0xf]
        %v1721 = vld [vmem:[#allocation10 + $0x4] sm:$0xf]
        %v1722 = vld [vmem:[#allocation10 + $0x8] sm:$0xf]
        %v1723 = vld [vmem:[#allocation10 + $0xc] sm:$0xf]
        %v1724 = vld [vmem:[#allocation10 + $0x10] sm:$0xf]
        %v1725 = vld [vmem:[#allocation10 + $0x14] sm:$0xf]
        %v1726 = vld [vmem:[#allocation10 + $0x18] sm:$0xf]
        %v1727 = vld [vmem:[#allocation10 + $0x1c] sm:$0xf]
        %v1728 = vld [vmem:[#allocation10 + $0x20] sm:$0xf]
        %v1729 = vld [vmem:[#allocation10 + $0x24] sm:$0xf]
        %v1730 = vld [vmem:[#allocation10 + $0x28] sm:$0xf]
        %v1731 = vld [vmem:[#allocation10 + $0x2c] sm:$0xf]
        %v1732 = vld [vmem:[#allocation10 + $0x30] sm:$0xf]
        %v1733 = vld [vmem:[#allocation10 + $0x34] sm:$0xf]
        %v1734 = vld [vmem:[#allocation10 + $0x38] sm:$0xf]
        %v1735 = vld [vmem:[#allocation10 + $0x3c] sm:$0xf]
        %v1736 = vld [vmem:[%s8] sm:$0x1]
        %v1738 = vlaneseq
        %v1739 = vshrl.u32 %v1738, 7
        %v1740 = vsub.s32 0, %v1739
        %v1741 = vrot.slane %v1736, %v1740
        %v1759 = vunpack.c.l.b16 %v1720
        %v1760 = vunpack.c.l.b16 %v1721
        %v1761 = vunpack.c.l.b16 %v1722
        %v1762 = vunpack.c.l.b16 %v1723
        %v1763 = vunpack.c.l.b16 %v1724
        %v1764 = vunpack.c.l.b16 %v1725
        %v1765 = vunpack.c.l.b16 %v1726
        %v1766 = vunpack.c.l.b16 %v1727
        %v1767 = vunpack.c.l.b16 %v1728
        %v1768 = vunpack.c.l.b16 %v1729
        %v1769 = vunpack.c.l.b16 %v1730
        %v1770 = vunpack.c.l.b16 %v1731
        %v1771 = vunpack.c.l.b16 %v1732
        %v1772 = vunpack.c.l.b16 %v1733
        %v1773 = vunpack.c.l.b16 %v1734
        %v1774 = vunpack.c.l.b16 %v1735
        %v1775 = vpack.c.b16 %v1760, %v1759
        %v1776 = vpack.c.b16 %v1762, %v1761
        %v1777 = vpack.c.b16 %v1764, %v1763
        %v1778 = vpack.c.b16 %v1766, %v1765
        %v1779 = vpack.c.b16 %v1768, %v1767
        %v1780 = vpack.c.b16 %v1770, %v1769
        %v1781 = vpack.c.b16 %v1772, %v1771
        %v1782 = vpack.c.b16 %v1774, %v1773
        %1791 = vmatprep.subr.bf16.mxu0 0
        %1792 = vmatpush1.bf16.msra.mxu0 %v1775
        %1793 = vmatprep.subr.bf16.mxu0 0
        %1794 = vmatpush1.bf16.msra.mxu0 %v1776
        %1795 = vmatprep.subr.bf16.mxu0 0
        %1796 = vmatpush1.bf16.msra.mxu0 %v1777
        %1797 = vmatprep.subr.bf16.mxu0 0
        %1798 = vmatpush1.bf16.msra.mxu0 %v1778
        %1799 = vmatprep.subr.bf16.mxu0 0
        %1800 = vmatpush1.bf16.msra.mxu0 %v1779
        %1801 = vmatprep.subr.bf16.mxu0 0
        %1802 = vmatpush1.bf16.msra.mxu0 %v1780
        %1803 = vmatprep.subr.bf16.mxu0 0
        %1804 = vmatpush1.bf16.msra.mxu0 %v1781
        %1805 = vmatprep.subr.bf16.mxu0 0
        %1806 = vmatpush1.bf16.msra.mxu0 %v1782
        %1807 = vmatprep.subr.bf16.mxu0 0
        %1808 = vmatpush1.bf16.msra.mxu0 0
        %1809 = vmatprep.subr.bf16.mxu0 0
        %1810 = vmatpush1.bf16.msra.mxu0 0
        %1811 = vmatprep.subr.bf16.mxu0 0
        %1812 = vmatpush1.bf16.msra.mxu0 0
        %1813 = vmatprep.subr.bf16.mxu0 0
        %1814 = vmatpush1.bf16.msra.mxu0 0
        %1815 = vmatprep.subr.bf16.mxu0 0
        %1816 = vmatpush1.bf16.msra.mxu0 0
        %1817 = vmatprep.subr.bf16.mxu0 0
        %1818 = vmatpush1.bf16.msra.mxu0 0
        %1819 = vmatprep.subr.bf16.mxu0 0
        %1820 = vmatpush1.bf16.msra.mxu0 0
        %1821 = vmatprep.subr.bf16.mxu0 0
        %1822 = vmatpush1.bf16.msra.mxu0 0
        %1823 = vmatprep.mubr.bf16.mxu0 0
        %1824 = vmatmul.mubr.bf16.gmra.mrb[0].mxu0 %v1713
        %v1825 = vpop.f32.mrb[0].mxu0
        %v1826 = vadd.f32 %v1741, %v1825
        %v1827 = vpop.f32.mrb[0].mxu0
        %v1828 = vpop.f32.mrb[0].mxu0
        %v1829 = vadd.f32 %v1741, %v1828
        %v1830 = vpop.f32.mrb[0].mxu0
        %1831 = vmatprep.mubr.bf16.mxu0 0
        %1832 = vmatmul.mubr.bf16.gmra.mrb[0].mxu0 %v1714
        %v1833 = vpop.f32.mrb[0].mxu0
        %v1834 = vadd.f32 %v1741, %v1833
        %v1835 = vpop.f32.mrb[0].mxu0
        %v1836 = vpop.f32.mrb[0].mxu0
        %v1837 = vadd.f32 %v1741, %v1836
        %v1838 = vpop.f32.mrb[0].mxu0
        %1839 = vmatprep.mubr.bf16.mxu0 0
        %1840 = vmatmul.mubr.bf16.gmra.mrb[0].mxu0 %v1715
        %v1841 = vpop.f32.mrb[0].mxu0
        %v1842 = vadd.f32 %v1741, %v1841
        %v1843 = vpop.f32.mrb[0].mxu0
        %v1844 = vpop.f32.mrb[0].mxu0
        %v1845 = vadd.f32 %v1741, %v1844
        %v1846 = vpop.f32.mrb[0].mxu0
        %1847 = vmatprep.mubr.bf16.mxu0 0
        %1848 = vmatmul.mubr.bf16.gmra.mrb[0].mxu0 %v1716
        %v1849 = vpop.f32.mrb[0].mxu0
        %v1850 = vadd.f32 %v1741, %v1849
        %v1851 = vpop.f32.mrb[0].mxu0
        %v1852 = vpop.f32.mrb[0].mxu0
        %v1853 = vadd.f32 %v1741, %v1852
        %v1854 = vpop.f32.mrb[0].mxu0
        %1855 = vmatprep.mubr.bf16.mxu0 0
        %1856 = vmatmul.mubr.bf16.gmra.mrb[0].mxu0 %v1717
        %v1857 = vpop.f32.mrb[0].mxu0
        %v1858 = vadd.f32 %v1741, %v1857
        %v1859 = vpop.f32.mrb[0].mxu0
        %v1860 = vpop.f32.mrb[0].mxu0
        %v1861 = vadd.f32 %v1741, %v1860
        %v1862 = vpop.f32.mrb[0].mxu0
        %1863 = vmatprep.mubr.bf16.mxu0 0
        %1864 = vmatmul.mubr.bf16.gmra.mrb[0].mxu0 %v1718
        %v1865 = vpop.f32.mrb[0].mxu0
        %v1866 = vadd.f32 %v1741, %v1865
        %v1867 = vpop.f32.mrb[0].mxu0
        %v1868 = vpop.f32.mrb[0].mxu0
        %v1869 = vadd.f32 %v1741, %v1868
        %v1870 = vpop.f32.mrb[0].mxu0
        %1871 = vmatprep.mubr.bf16.mxu0 0
        %1872 = vmatmul.mubr.bf16.gmra.mrb[0].mxu0 %v1719
        %v1873 = vpop.f32.mrb[0].mxu0
        %v1874 = vadd.f32 %v1741, %v1873
        %v1875 = vpop.f32.mrb[0].mxu0
        %v1876 = vpop.f32.mrb[0].mxu0
        %v1877 = vadd.f32 %v1741, %v1876
        %v1878 = vpop.f32.mrb[0].mxu0
        %1879 = vdwg.mxu0
        %v1880 = vpack.c.bf16 %v1829, %v1826
        %v1881 = vpack.c.bf16 %v1837, %v1834
        %v1882 = vpack.c.bf16 %v1845, %v1842
        %v1883 = vpack.c.bf16 %v1853, %v1850
        %v1884 = vpack.c.bf16 %v1861, %v1858
        %v1885 = vpack.c.bf16 %v1869, %v1866
        %v1886 = vpack.c.bf16 %v1877, %v1874
        %v1894 = vunpack.c.l.b16 %v1880
        %v1895 = vunpack.c.h.b16 %v1880
        %v1896 = vunpack.c.l.b16 %v1881
        %v1897 = vunpack.c.h.b16 %v1881
        %v1898 = vunpack.c.l.b16 %v1882
        %v1899 = vunpack.c.h.b16 %v1882
        %v1900 = vunpack.c.l.b16 %v1883
        %v1901 = vunpack.c.h.b16 %v1883
        %v1902 = vunpack.c.l.b16 %v1884
        %v1903 = vunpack.c.h.b16 %v1884
        %v1904 = vunpack.c.l.b16 %v1885
        %v1905 = vunpack.c.h.b16 %v1885
        %v1906 = vunpack.c.l.b16 %v1886
        %v1907 = vunpack.c.h.b16 %v1886
        %v1908 = vpack.c.b16 %v1894, %v1894
        %v1909 = vpack.c.b16 %v1895, %v1895
        %v1910 = vpack.c.b16 %v1896, %v1896
        %v1911 = vpack.c.b16 %v1897, %v1897
        %v1912 = vpack.c.b16 %v1898, %v1898
        %v1913 = vpack.c.b16 %v1899, %v1899
        %v1914 = vpack.c.b16 %v1900, %v1900
        %v1915 = vpack.c.b16 %v1901, %v1901
        %v1916 = vpack.c.b16 %v1902, %v1902
        %v1917 = vpack.c.b16 %v1903, %v1903
        %v1918 = vpack.c.b16 %v1904, %v1904
        %v1919 = vpack.c.b16 %v1905, %v1905
        %v1920 = vpack.c.b16 %v1906, %v1906
        %v1921 = vpack.c.b16 %v1907, %v1907
        %1936 = vst [vmem:[%s409] sm:$0xf] %v1908
        %1937 = vst [vmem:[%s409 + $0x4] sm:$0xf] %v1909
        %1938 = vst [vmem:[%s409 + $0x8] sm:$0xf] %v1910
        %1939 = vst [vmem:[%s409 + $0xc] sm:$0xf] %v1911
        %1940 = vst [vmem:[%s409 + $0x10] sm:$0xf] %v1912
        %1941 = vst [vmem:[%s409 + $0x14] sm:$0xf] %v1913
        %1942 = vst [vmem:[%s409 + $0x18] sm:$0xf] %v1914
        %1943 = vst [vmem:[%s409 + $0x1c] sm:$0xf] %v1915
        %1944 = vst [vmem:[%s409 + $0x20] sm:$0xf] %v1916
        %1945 = vst [vmem:[%s409 + $0x24] sm:$0xf] %v1917
        %1946 = vst [vmem:[%s409 + $0x28] sm:$0xf] %v1918
        %1947 = vst [vmem:[%s409 + $0x2c] sm:$0xf] %v1919
        %1948 = vst [vmem:[%s409 + $0x30] sm:$0xf] %v1920
        %1949 = vst [vmem:[%s409 + $0x34] sm:$0xf] %v1921
        %s1950 = sand.u32 %s230, 1
        %s1951 = scalar_lea.sflag [#allocation4], %s1950
        %s1952 = sand.u32 %s230, 1
        %s1953 = smul.addr %s1952, 56
        %s1954 = scalar_lea.vmem [#allocation11], %s1953
        // Predicated region
        $region77: #{tpu_custom_call.1} parent=55 // pred_check
          %p1955 = pneg %p240
        $region78: #{tpu_custom_call.1} parent=55 // pred_check_branch
          %1957 = sbr.rel (%p1955) target = $region80
        $region79: #{tpu_custom_call.1} parent=55 // pred_region
          %s1958 = smul.u32 14, %s28
          %s1960 = ssub.s32 896, 896
          %1961 = vsyncadd %s1951, %s1960
          %s1962 = smul.addr %s1958, 64
          %s1963 = scalar_lea.hbm %s9, %s1962
          %s1964 = sshll.u32 %s1954, 4
          %s1965 = int_to_ptr.vmem [resolvable:$true] %s1964
          %1970 = dma.vmem_to_hbm [thread:$0]  %s1965, 896, %s1963, %s1951, 64, 64, 4
        $region80: #{tpu_custom_call.1} parent=55 // pred_fallthru
          _
      $region56: #{tpu_custom_call.1} parent=5 // pred_fallthru
        _
      %p1971 = scmp.le.s32.totalorder 2, %s23
      // Predicated region
      $region81: #{tpu_custom_call.1} parent=5 // pred_check
        %p1972 = pneg %p1971
      $region82: #{tpu_custom_call.1} parent=5 // pred_check_branch
        %1974 = sbr.rel (%p1972) target = $region84
      $region83: #{tpu_custom_call.1} parent=5 // pred_region
        %s1975 = ssub.s32 %s23, 2
        // Predicated region
        $region85: #{tpu_custom_call.1} parent=83 // pred_check
          %p1976 = pneg %p246
        $region86: #{tpu_custom_call.1} parent=83 // pred_check_branch
          %1978 = sbr.rel (%p1976) target = $region88
        $region87: #{tpu_custom_call.1} parent=83 // pred_region
          %s1979 = sand.u32 %s231, 1
          %s1980 = scalar_lea.sflag [#allocation4], %s1979
          %s1981 = sand.u32 %s231, 1
          %s1982 = smul.addr %s1981, 56
          %s1983 = scalar_lea.vmem [#allocation11], %s1982
          %1984 = dma.done %s1980, 896
        $region88: #{tpu_custom_call.1} parent=83 // pred_fallthru
          _
      $region84: #{tpu_custom_call.1} parent=5 // pred_fallthru
        _
    $region6: #{tpu_custom_call.1} parent=1 // loop_footer
      %s27 = sadd.s32 1, %s23
    $region7: #{tpu_custom_call.1} parent=1 // loop_footer_branch
      %22 = sbr.rel target = $region3
    $region8: #{tpu_custom_call.1} parent=1 // loop_exit
      _
    %1985 = vsyncpa [#allocation3], 1
    %s1986 = scalar_lea.sflag [#allocation3], 1
    %1987 = vsyncpa %s1986, 1
    %1988 = vsyncpa [#allocation6], 1
    %1989 = vsyncpa [#allocation9], 1
    %1990 = vsyncpa [#allocation4], 1
    %s1991 = scalar_lea.sflag [#allocation4], 1
    %1992 = vsyncpa %s1991, 1

</llo_original>
